<compile_context>
chip_gen: v5e
topology: v5e:2x2
jax: 0.10.0
libtpu: 0.0.40
codegen_flags: <defaults>
</compile_context>

<pallas_src>
import jax
import jax.numpy as jnp
from jax import lax
from jax.experimental import pallas as pl
from jax.experimental.pallas import tpu as pltpu


def _round_up(x, m):
    return ((x + m - 1) // m) * m


# ----------------------------- LSTM kernel ---------------------------------
def _lstm_kernel(q_ref, r_ref, corr_ref, wih_ref, whh_ref, b_ref, out_ref,
                 h_scr, c_scr):
    tb = pl.program_id(0)

    @pl.when(tb == 0)
    def _():
        h_scr[...] = jnp.zeros_like(h_scr)
        c_scr[...] = jnp.zeros_like(c_scr)

    B, T, E = q_ref.shape
    H = h_scr.shape[-1]

    # Fused correctness-embedding lookup (2 rows, r in {0,1}) + add:
    # corr_emb[r] == corr0 + r * (corr1 - corr0).
    r_f = r_ref[...].astype(jnp.float32)                     # (B, T, 1)
    c0 = corr_ref[0:1, :].reshape(1, 1, E)
    c1 = corr_ref[1:2, :].reshape(1, 1, E)
    x = q_ref[...] + c0 + r_f * (c1 - c0)                    # (B, T, E)

    # Hoisted input projection + bias: one (B*T, E) x (E, 4H) matmul per time
    # block instead of one tiny (B, E) push per timestep in the recurrence.
    gates_in = (jnp.dot(x.reshape(B * T, E), wih_ref[...],
                        preferred_element_type=jnp.float32)
                + b_ref[...])                                # (B*T, 4H)
    gates_in = gates_in.reshape(B, T, 4 * H)

    # Sequential recurrence, fully unrolled over the time block: only the
    # h-path matmul + gate elementwise stay on the latency-critical chain.
    h = h_scr[...]
    c = c_scr[...]
    for t in range(T):                       # T is a static Python int
        g = gates_in[:, t, :] + jnp.dot(h, whh_ref[...],
                                        preferred_element_type=jnp.float32)
        # PyTorch gate order: input, forget, cell(g), output
        i_g = jax.nn.sigmoid(g[:, 0 * H:1 * H])
        f_g = jax.nn.sigmoid(g[:, 1 * H:2 * H])
        g_g = jnp.tanh(g[:, 2 * H:3 * H])
        o_g = jax.nn.sigmoid(g[:, 3 * H:4 * H])
        c = f_g * c + i_g * g_g
        h = o_g * jnp.tanh(c)
        out_ref[:, t, :] = h.astype(out_ref.dtype)
    h_scr[...] = h
    c_scr[...] = c


def lstm_forward(q, r3, corr_emb, w_ih, w_hh, b_lstm, *, t_blk):
    """q: (B, L, E) f32; r3: (B, L, 1) i32.  L must be a multiple of t_blk."""
    B, L, E = q.shape
    H = w_hh.shape[0]
    assert L % t_blk == 0 and t_blk % 8 == 0
    return pl.pallas_call(
        _lstm_kernel,
        out_shape=jax.ShapeDtypeStruct((B, L, H), jnp.float32),
        grid_spec=pltpu.PrefetchScalarGridSpec(
            num_scalar_prefetch=0,
            grid=(L // t_blk,),
            in_specs=[
                pl.BlockSpec((B, t_blk, E), lambda t: (0, t, 0)),   # q block
                pl.BlockSpec((B, t_blk, 1), lambda t: (0, t, 0)),   # r block
                pl.BlockSpec((2, E), lambda t: (0, 0)),             # corr_emb
                pl.BlockSpec((E, 4 * H), lambda t: (0, 0)),         # W_ih^T
                pl.BlockSpec((H, 4 * H), lambda t: (0, 0)),         # W_hh^T
                pl.BlockSpec((1, 4 * H), lambda t: (0, 0)),         # b_ih+b_hh
            ],
            out_specs=pl.BlockSpec((B, t_blk, H), lambda t: (0, t, 0)),
            scratch_shapes=[pltpu.VMEM((B, H), jnp.float32),        # h state
                            pltpu.VMEM((B, H), jnp.float32)],       # c state
        ),
        compiler_params=pltpu.CompilerParams(
            dimension_semantics=("arbitrary",)),   # time is sequential
    )(q, r3, corr_emb, w_ih, w_hh, b_lstm)


# ----------------------- prediction-head kernel -----------------------------
def _pred_kernel(lstm_ref, que_ref, wl_ref, bl_ref, wq_ref, bq_ref,
                 w1a_ref, w1b_ref, b1_ref, wo_ref, bo_ref, out_ref):
    t_l = jax.nn.relu(jnp.dot(lstm_ref[...], wl_ref[...],
                              preferred_element_type=jnp.float32) + bl_ref[...])
    t_q = jax.nn.relu(jnp.dot(que_ref[...], wq_ref[...],
                              preferred_element_type=jnp.float32) + bq_ref[...])
    # cat((t_l, t_q), -1) @ fc1.W^T  ==  t_l @ W1a + t_q @ W1b  (fc1 split)
    x = jax.nn.relu(jnp.dot(t_l, w1a_ref[...],
                            preferred_element_type=jnp.float32)
                    + jnp.dot(t_q, w1b_ref[...],
                              preferred_element_type=jnp.float32)
                    + b1_ref[...])                            # (TILE_N, U)
    # TODO(synk): dropout(pred_dropout=0) is identity at inference; omitted.
    # Lane-dense logits: (1, U) . (TILE_N, U)^T -> (1, TILE_N)  (like q @ k.T),
    # so the store is a full 128-lane vst instead of a (N,1) masked column.
    logits = lax.dot_general(wo_ref[...], x,
                             dimension_numbers=(((1,), (1,)), ((), ())),
                             preferred_element_type=jnp.float32)
    out_ref[...] = jax.nn.sigmoid(logits + bo_ref[...])       # (1, TILE_N)


def prediction_forward(lstm_flat, que_flat, params, *, tile_n):
    n_pad, H = lstm_flat.shape
    E = que_flat.shape[1]
    assert n_pad % tile_n == 0 and tile_n % 128 == 0
    return pl.pallas_call(
        _pred_kernel,
        out_shape=jax.ShapeDtypeStruct((1, n_pad), jnp.float32),
        grid_spec=pltpu.PrefetchScalarGridSpec(
            num_scalar_prefetch=0,
            grid=(n_pad // tile_n,),
            in_specs=[
                pl.BlockSpec((tile_n, H), lambda i: (i, 0)),
                pl.BlockSpec((tile_n, E), lambda i: (i, 0)),
                pl.BlockSpec(params["wl"].shape, lambda i: (0, 0)),
                pl.BlockSpec(params["bl"].shape, lambda i: (0, 0)),
                pl.BlockSpec(params["wq"].shape, lambda i: (0, 0)),
                pl.BlockSpec(params["bq"].shape, lambda i: (0, 0)),
                pl.BlockSpec(params["w1a"].shape, lambda i: (0, 0)),
                pl.BlockSpec(params["w1b"].shape, lambda i: (0, 0)),
                pl.BlockSpec(params["b1"].shape, lambda i: (0, 0)),
                pl.BlockSpec(params["wo_row"].shape, lambda i: (0, 0)),
                pl.BlockSpec(params["bo"].shape, lambda i: (0, 0)),
            ],
            out_specs=pl.BlockSpec((1, tile_n), lambda i: (0, i)),
        ),
        compiler_params=pltpu.CompilerParams(
            dimension_semantics=("parallel",)),    # row tiles are independent
    )(lstm_flat, que_flat,
      params["wl"], params["bl"], params["wq"], params["bq"],
      params["w1a"], params["w1b"], params["b1"],
      params["wo_row"], params["bo"])


# ----------------------------- full model ----------------------------------
def embedded_que_dkt_forward(params, q_embeddings, r, target_embs,
                             *, t_blk=None, tile_n=None):
    B, L, E = q_embeddings.shape
    H = params["w_hh"].shape[0]

    # ----- LSTM over the full sequence (corr-embedding add fused in-kernel) -
    if t_blk is None:
        t_blk = min(32, _round_up(L, 8))
    L_pad = _round_up(L, t_blk)
    q = q_embeddings
    r3 = r.reshape(B, L, 1).astype(jnp.int32)
    if L_pad != L:
        q = jnp.pad(q, ((0, 0), (0, L_pad - L), (0, 0)))
        r3 = jnp.pad(r3, ((0, 0), (0, L_pad - L), (0, 0)))
    lstm_out = lstm_forward(q, r3, params["corr_emb"], params["w_ih"],
                            params["w_hh"], params["b_lstm"],
                            t_blk=t_blk)                      # (B, L_pad, H)
    lstm_last = lstm_out[:, :L - 1, :]                        # (B, L-1, H)

    # ----- prediction head over flattened rows, lane-dense output -----------
    N = B * (L - 1)
    if tile_n is None:
        tile_n = min(512, 128 * pl.cdiv(N, 128))
    N_pad = _round_up(N, tile_n)
    lstm_flat = lstm_last.reshape(N, H)
    que_flat = target_embs.reshape(N, E)
    if N_pad != N:
        lstm_flat = jnp.pad(lstm_flat, ((0, N_pad - N), (0, 0)))
        que_flat = jnp.pad(que_flat, ((0, N_pad - N), (0, 0)))
    probs = prediction_forward(lstm_flat, que_flat, params, tile_n=tile_n)
    return {"y": probs[0, :N].reshape(B, L - 1)}


# ----------------------------- reference (pure JAX) -------------------------
def reference_forward(params, q_embeddings, r, target_embs):
    corr = params["corr_emb"][r]
    x = q_embeddings + corr
    B, L, E = x.shape
    H = params["w_hh"].shape[0]

    def step(carry, x_t):
        h, c = carry
        g = x_t @ params["w_ih"] + h @ params["w_hh"] + params["b_lstm"][0]
        i_g = jax.nn.sigmoid(g[:, :H])
        f_g = jax.nn.sigmoid(g[:, H:2 * H])
        g_g = jnp.tanh(g[:, 2 * H:3 * H])
        o_g = jax.nn.sigmoid(g[:, 3 * H:])
        c = f_g * c + i_g * g_g
        h = o_g * jnp.tanh(c)
        return (h, c), h

    h0 = jnp.zeros((B, H), jnp.float32)
    c0 = jnp.zeros((B, H), jnp.float32)
    _, hs = jax.lax.scan(step, (h0, c0), jnp.transpose(x, (1, 0, 2)))
    lstm_out = jnp.transpose(hs, (1, 0, 2))
    lstm_last = lstm_out[:, :-1, :]
    t_l = jax.nn.relu(lstm_last @ params["wl"] + params["bl"][0])
    t_q = jax.nn.relu(target_embs @ params["wq"] + params["bq"][0])
    xx = jax.nn.relu(t_l @ params["w1a"] + t_q @ params["w1b"]
                     + params["b1"][0])
    logits = xx @ params["wo_row"][0] + params["bo"][0, 0]
    return jax.nn.sigmoid(logits)


# ----------------------------- params --------------------------------------
def init_params(key, E, H, P, U):
    ks = jax.random.split(key, 14)

    def u(k, shape, fan_in):
        bound = 1.0 / (fan_in ** 0.5)
        return jax.random.uniform(k, shape, jnp.float32, -bound, bound)

    return {
        "corr_emb": jax.random.normal(ks[0], (2, E), jnp.float32),
        # LSTM: W_ih (4H,E), W_hh (4H,H) stored transposed; biases fused
        "w_ih": u(ks[1], (E, 4 * H), H),
        "w_hh": u(ks[2], (H, 4 * H), H),
        "b_lstm": u(ks[3], (1, 4 * H), H) + u(ks[4], (1, 4 * H), H),
        # prediction head
        "wl": u(ks[5], (H, P), H),          # lstm_transform_layer
        "bl": u(ks[6], (1, P), H),
        "wq": u(ks[7], (E, P), E),          # question_transform_layer
        "bq": u(ks[8], (1, P), E),
        "w1a": u(ks[9], (P, U), 2 * P),     # fc1, split over the concat
        "w1b": u(ks[10], (P, U), 2 * P),
        "b1": u(ks[11], (1, U), 2 * P),
        "wo_row": u(ks[12], (1, U), U),     # output_layer, stored as a row
        "bo": u(ks[13], (1, 1), U),
    }


if __name__ == "__main__":
    B, L, E = 2, 8, 32            # batch, seq, emb_size
    H, P, U = 32, 32, 32          # hidden_size, prediction_hidden, up_projection

    key = jax.random.PRNGKey(0)
    k_p, k_q, k_r, k_t = jax.random.split(key, 4)
    params = init_params(k_p, E, H, P, U)

    q_embeddings = jax.random.normal(k_q, (B, L, E), jnp.float32)
    r = jax.random.randint(k_r, (B, L), 0, 2, jnp.int32)
    target_embs = jax.random.normal(k_t, (B, L - 1, E), jnp.float32)

    out = embedded_que_dkt_forward(params, q_embeddings, r, target_embs)
    y = jax.block_until_ready(out["y"])

    y_ref = jax.block_until_ready(
        reference_forward(params, q_embeddings, r, target_embs))

    assert y.shape == (B, L - 1), y.shape
    assert bool(jnp.all(jnp.isfinite(y)))
    assert bool(jnp.allclose(y, y_ref, atol=2e-3, rtol=2e-3)), (y, y_ref)
    print("KERNEL_OK")
</pallas_src>

<mosaic_0001>
module attributes {stable_mosaic.version = 11 : i64} {
  func.func @_lstm_kernel(%arg0: i32, %arg1: memref<2x8x32xf32, #tpu.memory_space<vmem>>, %arg2: memref<2x8x1xi32, #tpu.memory_space<vmem>>, %arg3: memref<2x32xf32, #tpu.memory_space<vmem>>, %arg4: memref<32x128xf32, #tpu.memory_space<vmem>>, %arg5: memref<32x128xf32, #tpu.memory_space<vmem>>, %arg6: memref<1x128xf32, #tpu.memory_space<vmem>>, %arg7: memref<2x8x32xf32, #tpu.memory_space<vmem>>, %arg8: memref<2x32xf32, #tpu.memory_space<vmem>>, %arg9: memref<2x32xf32, #tpu.memory_space<vmem>>) attributes {dimension_semantics = [#tpu.dimension_semantics<arbitrary>], iteration_bounds = array<i64: 1>, scalar_prefetch = 0 : i64, scratch_operands = 2 : i64, tpu.core_type = #tpu.core_type<tc>, window_params = [{transform_indices = @transform_0, window_bounds = array<i64: 2, 8, 32>}, {transform_indices = @transform_1, window_bounds = array<i64: 2, 8, 1>}, {pipeline_mode = #tpu.pipeline_mode<synchronous>, transform_indices = @transform_2, window_bounds = array<i64: 2, 32>}, {pipeline_mode = #tpu.pipeline_mode<synchronous>, transform_indices = @transform_3, window_bounds = array<i64: 32, 128>}, {pipeline_mode = #tpu.pipeline_mode<synchronous>, transform_indices = @transform_4, window_bounds = array<i64: 32, 128>}, {pipeline_mode = #tpu.pipeline_mode<synchronous>, transform_indices = @transform_5, window_bounds = array<i64: 1, 128>}, {transform_indices = @transform_6, window_bounds = array<i64: 2, 8, 32>}]} {
    %c0_i32 = arith.constant 0 : i32
    %0 = arith.cmpi eq, %arg0, %c0_i32 : i32
    %1 = arith.extui %0 : i1 to i32
    %c0_i32_0 = arith.constant 0 : i32
    %2 = arith.cmpi ne, %1, %c0_i32_0 : i32
    scf.if %2 {
      %cst_87 = arith.constant 0.000000e+00 : f32
      %292 = vector.broadcast %cst_87 : f32 to vector<2x32xf32>
      %c0_88 = arith.constant 0 : index
      %c0_89 = arith.constant 0 : index
      %293 = vector.load %arg8[%c0_88, %c0_89] : memref<2x32xf32, #tpu.memory_space<vmem>>, vector<2x32xf32>
      tpu.vector_store %arg8[%c0_88, %c0_89], %292 {strides = array<i32>} : memref<2x32xf32, #tpu.memory_space<vmem>>, vector<2x32xf32>,
      %cst_90 = arith.constant 0.000000e+00 : f32
      %294 = vector.broadcast %cst_90 : f32 to vector<2x32xf32>
      %c0_91 = arith.constant 0 : index
      %c0_92 = arith.constant 0 : index
      %295 = vector.load %arg9[%c0_91, %c0_92] : memref<2x32xf32, #tpu.memory_space<vmem>>, vector<2x32xf32>
      tpu.vector_store %arg9[%c0_91, %c0_92], %294 {strides = array<i32>} : memref<2x32xf32, #tpu.memory_space<vmem>>, vector<2x32xf32>,
    } else {
    }
    %c0 = arith.constant 0 : index
    %c0_1 = arith.constant 0 : index
    %c0_2 = arith.constant 0 : index
    %3 = vector.load %arg2[%c0, %c0_1, %c0_2] : memref<2x8x1xi32, #tpu.memory_space<vmem>>, vector<2x8x1xi32>
    %4 = arith.sitofp %3 : vector<2x8x1xi32> to vector<2x8x1xf32>
    %c0_3 = arith.constant 0 : index
    %c0_4 = arith.constant 0 : index
    %5 = vector.load %arg3[%c0_3, %c0_4] : memref<2x32xf32, #tpu.memory_space<vmem>>, vector<1x32xf32>
    %6 = vector.shape_cast %5 : vector<1x32xf32> to vector<1x1x32xf32>
    %c1 = arith.constant 1 : index
    %c0_5 = arith.constant 0 : index
    %7 = vector.load %arg3[%c1, %c0_5] : memref<2x32xf32, #tpu.memory_space<vmem>>, vector<1x32xf32>
    %8 = vector.shape_cast %7 : vector<1x32xf32> to vector<1x1x32xf32>
    %c0_6 = arith.constant 0 : index
    %c0_7 = arith.constant 0 : index
    %c0_8 = arith.constant 0 : index
    %9 = vector.load %arg1[%c0_6, %c0_7, %c0_8] : memref<2x8x32xf32, #tpu.memory_space<vmem>>, vector<2x8x32xf32>
    %10 = vector.broadcast %6 : vector<1x1x32xf32> to vector<2x8x32xf32>
    %11 = arith.addf %9, %10 : vector<2x8x32xf32>
    %12 = arith.subf %8, %6 : vector<1x1x32xf32>
    %13 = vector.broadcast %4 : vector<2x8x1xf32> to vector<2x8x32xf32>
    %14 = vector.broadcast %12 : vector<1x1x32xf32> to vector<2x8x32xf32>
    %15 = arith.mulf %13, %14 : vector<2x8x32xf32>
    %16 = arith.addf %11, %15 : vector<2x8x32xf32>
    %17 = vector.shape_cast %16 : vector<2x8x32xf32> to vector<16x32xf32>
    %c0_9 = arith.constant 0 : index
    %c0_10 = arith.constant 0 : index
    %18 = vector.load %arg4[%c0_9, %c0_10] : memref<32x128xf32, #tpu.memory_space<vmem>>, vector<32x128xf32>
    %cst = arith.constant dense<0.000000e+00> : vector<16x128xf32>
    %19 = tpu.matmul %17, %18, %cst {dimension_numbers = #tpu.dot_dimension_numbers<[1], [0], [0], [1], [0, 0, 1, 1], [], []>} : vector<16x32xf32>, vector<32x128xf32>, vector<16x128xf32> -> vector<16x128xf32>
    %c0_11 = arith.constant 0 : index
    %c0_12 = arith.constant 0 : index
    %20 = vector.load %arg6[%c0_11, %c0_12] : memref<1x128xf32, #tpu.memory_space<vmem>>, vector<1x128xf32>
    %21 = vector.broadcast %20 : vector<1x128xf32> to vector<16x128xf32>
    %22 = arith.addf %19, %21 : vector<16x128xf32>
    %23 = vector.shape_cast %22 : vector<16x128xf32> to vector<2x8x128xf32>
    %c0_13 = arith.constant 0 : index
    %c0_14 = arith.constant 0 : index
    %24 = vector.load %arg8[%c0_13, %c0_14] : memref<2x32xf32, #tpu.memory_space<vmem>>, vector<2x32xf32>
    %c0_15 = arith.constant 0 : index
    %c0_16 = arith.constant 0 : index
    %25 = vector.load %arg9[%c0_15, %c0_16] : memref<2x32xf32, #tpu.memory_space<vmem>>, vector<2x32xf32>
    %26 = vector.extract_strided_slice %23 {offsets = [0, 0, 0], sizes = [2, 1, 128], strides = [1, 1, 1]} : vector<2x8x128xf32> to vector<2x1x128xf32>
    %27 = vector.shape_cast %26 : vector<2x1x128xf32> to vector<2x128xf32>
    %c0_17 = arith.constant 0 : index
    %c0_18 = arith.constant 0 : index
    %28 = vector.load %arg5[%c0_17, %c0_18] : memref<32x128xf32, #tpu.memory_space<vmem>>, vector<32x128xf32>
    %cst_19 = arith.constant dense<0.000000e+00> : vector<2x128xf32>
    %29 = tpu.matmul %24, %28, %cst_19 {dimension_numbers = #tpu.dot_dimension_numbers<[1], [0], [0], [1], [0, 0, 1, 1], [], []>} : vector<2x32xf32>, vector<32x128xf32>, vector<2x128xf32> -> vector<2x128xf32>
    %30 = arith.addf %27, %29 : vector<2x128xf32>
    %31 = vector.extract_strided_slice %30 {offsets = [0, 0], sizes = [2, 32], strides = [1, 1]} : vector<2x128xf32> to vector<2x32xf32>
    %32 = arith.negf %31 : vector<2x32xf32>
    %33 = math.exp %32 : vector<2x32xf32>
    %cst_20 = arith.constant 1.000000e+00 : f32
    %34 = vector.broadcast %cst_20 : f32 to vector<2x32xf32>
    %35 = arith.addf %34, %33 : vector<2x32xf32>
    %36 = arith.divf %34, %35 : vector<2x32xf32>
    %37 = vector.extract_strided_slice %30 {offsets = [0, 32], sizes = [2, 32], strides = [1, 1]} : vector<2x128xf32> to vector<2x32xf32>
    %38 = arith.negf %37 : vector<2x32xf32>
    %39 = math.exp %38 : vector<2x32xf32>
    %cst_21 = arith.constant 1.000000e+00 : f32
    %40 = vector.broadcast %cst_21 : f32 to vector<2x32xf32>
    %41 = arith.addf %40, %39 : vector<2x32xf32>
    %42 = arith.divf %40, %41 : vector<2x32xf32>
    %43 = vector.extract_strided_slice %30 {offsets = [0, 64], sizes = [2, 32], strides = [1, 1]} : vector<2x128xf32> to vector<2x32xf32>
    %44 = math.tanh %43 : vector<2x32xf32>
    %45 = vector.extract_strided_slice %30 {offsets = [0, 96], sizes = [2, 32], strides = [1, 1]} : vector<2x128xf32> to vector<2x32xf32>
    %46 = arith.negf %45 : vector<2x32xf32>
    %47 = math.exp %46 : vector<2x32xf32>
    %cst_22 = arith.constant 1.000000e+00 : f32
    %48 = vector.broadcast %cst_22 : f32 to vector<2x32xf32>
    %49 = arith.addf %48, %47 : vector<2x32xf32>
    %50 = arith.divf %48, %49 : vector<2x32xf32>
    %51 = arith.mulf %42, %25 : vector<2x32xf32>
    %52 = arith.mulf %36, %44 : vector<2x32xf32>
    %53 = arith.addf %51, %52 : vector<2x32xf32>
    %54 = math.tanh %53 : vector<2x32xf32>
    %55 = arith.mulf %50, %54 : vector<2x32xf32>
    %c0_23 = arith.constant 0 : index
    %c0_24 = arith.constant 0 : index
    %c0_25 = arith.constant 0 : index
    %56 = vector.load %arg7[%c0_23, %c0_24, %c0_25] : memref<2x8x32xf32, #tpu.memory_space<vmem>>, vector<2x1x32xf32>
    %57 = vector.shape_cast %56 : vector<2x1x32xf32> to vector<2x32xf32>
    %58 = vector.shape_cast %55 : vector<2x32xf32> to vector<2x1x32xf32>
    tpu.vector_store %arg7[%c0_23, %c0_24, %c0_25], %58 {strides = array<i32>} : memref<2x8x32xf32, #tpu.memory_space<vmem>>, vector<2x1x32xf32>,
    %59 = vector.extract_strided_slice %23 {offsets = [0, 1, 0], sizes = [2, 1, 128], strides = [1, 1, 1]} : vector<2x8x128xf32> to vector<2x1x128xf32>
    %60 = vector.shape_cast %59 : vector<2x1x128xf32> to vector<2x128xf32>
    %c0_26 = arith.constant 0 : index
    %c0_27 = arith.constant 0 : index
    %61 = vector.load %arg5[%c0_26, %c0_27] : memref<32x128xf32, #tpu.memory_space<vmem>>, vector<32x128xf32>
    %cst_28 = arith.constant dense<0.000000e+00> : vector<2x128xf32>
    %62 = tpu.matmul %55, %61, %cst_28 {dimension_numbers = #tpu.dot_dimension_numbers<[1], [0], [0], [1], [0, 0, 1, 1], [], []>} : vector<2x32xf32>, vector<32x128xf32>, vector<2x128xf32> -> vector<2x128xf32>
    %63 = arith.addf %60, %62 : vector<2x128xf32>
    %64 = vector.extract_strided_slice %63 {offsets = [0, 0], sizes = [2, 32], strides = [1, 1]} : vector<2x128xf32> to vector<2x32xf32>
    %65 = arith.negf %64 : vector<2x32xf32>
    %66 = math.exp %65 : vector<2x32xf32>
    %cst_29 = arith.constant 1.000000e+00 : f32
    %67 = vector.broadcast %cst_29 : f32 to vector<2x32xf32>
    %68 = arith.addf %67, %66 : vector<2x32xf32>
    %69 = arith.divf %67, %68 : vector<2x32xf32>
    %70 = vector.extract_strided_slice %63 {offsets = [0, 32], sizes = [2, 32], strides = [1, 1]} : vector<2x128xf32> to vector<2x32xf32>
    %71 = arith.negf %70 : vector<2x32xf32>
    %72 = math.exp %71 : vector<2x32xf32>
    %cst_30 = arith.constant 1.000000e+00 : f32
    %73 = vector.broadcast %cst_30 : f32 to vector<2x32xf32>
    %74 = arith.addf %73, %72 : vector<2x32xf32>
    %75 = arith.divf %73, %74 : vector<2x32xf32>
    %76 = vector.extract_strided_slice %63 {offsets = [0, 64], sizes = [2, 32], strides = [1, 1]} : vector<2x128xf32> to vector<2x32xf32>
    %77 = math.tanh %76 : vector<2x32xf32>
    %78 = vector.extract_strided_slice %63 {offsets = [0, 96], sizes = [2, 32], strides = [1, 1]} : vector<2x128xf32> to vector<2x32xf32>
    %79 = arith.negf %78 : vector<2x32xf32>
    %80 = math.exp %79 : vector<2x32xf32>
    %cst_31 = arith.constant 1.000000e+00 : f32
    %81 = vector.broadcast %cst_31 : f32 to vector<2x32xf32>
    %82 = arith.addf %81, %80 : vector<2x32xf32>
    %83 = arith.divf %81, %82 : vector<2x32xf32>
    %84 = arith.mulf %75, %53 : vector<2x32xf32>
    %85 = arith.mulf %69, %77 : vector<2x32xf32>
    %86 = arith.addf %84, %85 : vector<2x32xf32>
    %87 = math.tanh %86 : vector<2x32xf32>
    %88 = arith.mulf %83, %87 : vector<2x32xf32>
    %c0_32 = arith.constant 0 : index
    %c1_33 = arith.constant 1 : index
    %c0_34 = arith.constant 0 : index
    %89 = vector.load %arg7[%c0_32, %c1_33, %c0_34] : memref<2x8x32xf32, #tpu.memory_space<vmem>>, vector<2x1x32xf32>
    %90 = vector.shape_cast %89 : vector<2x1x32xf32> to vector<2x32xf32>
    %91 = vector.shape_cast %88 : vector<2x32xf32> to vector<2x1x32xf32>
    tpu.vector_store %arg7[%c0_32, %c1_33, %c0_34], %91 {strides = array<i32>} : memref<2x8x32xf32, #tpu.memory_space<vmem>>, vector<2x1x32xf32>,
    %92 = vector.extract_strided_slice %23 {offsets = [0, 2, 0], sizes = [2, 1, 128], strides = [1, 1, 1]} : vector<2x8x128xf32> to vector<2x1x128xf32>
    %93 = vector.shape_cast %92 : vector<2x1x128xf32> to vector<2x128xf32>
    %c0_35 = arith.constant 0 : index
    %c0_36 = arith.constant 0 : index
    %94 = vector.load %arg5[%c0_35, %c0_36] : memref<32x128xf32, #tpu.memory_space<vmem>>, vector<32x128xf32>
    %cst_37 = arith.constant dense<0.000000e+00> : vector<2x128xf32>
    %95 = tpu.matmul %88, %94, %cst_37 {dimension_numbers = #tpu.dot_dimension_numbers<[1], [0], [0], [1], [0, 0, 1, 1], [], []>} : vector<2x32xf32>, vector<32x128xf32>, vector<2x128xf32> -> vector<2x128xf32>
    %96 = arith.addf %93, %95 : vector<2x128xf32>
    %97 = vector.extract_strided_slice %96 {offsets = [0, 0], sizes = [2, 32], strides = [1, 1]} : vector<2x128xf32> to vector<2x32xf32>
    %98 = arith.negf %97 : vector<2x32xf32>
    %99 = math.exp %98 : vector<2x32xf32>
    %cst_38 = arith.constant 1.000000e+00 : f32
    %100 = vector.broadcast %cst_38 : f32 to vector<2x32xf32>
    %101 = arith.addf %100, %99 : vector<2x32xf32>
    %102 = arith.divf %100, %101 : vector<2x32xf32>
    %103 = vector.extract_strided_slice %96 {offsets = [0, 32], sizes = [2, 32], strides = [1, 1]} : vector<2x128xf32> to vector<2x32xf32>
    %104 = arith.negf %103 : vector<2x32xf32>
    %105 = math.exp %104 : vector<2x32xf32>
    %cst_39 = arith.constant 1.000000e+00 : f32
    %106 = vector.broadcast %cst_39 : f32 to vector<2x32xf32>
    %107 = arith.addf %106, %105 : vector<2x32xf32>
    %108 = arith.divf %106, %107 : vector<2x32xf32>
    %109 = vector.extract_strided_slice %96 {offsets = [0, 64], sizes = [2, 32], strides = [1, 1]} : vector<2x128xf32> to vector<2x32xf32>
    %110 = math.tanh %109 : vector<2x32xf32>
    %111 = vector.extract_strided_slice %96 {offsets = [0, 96], sizes = [2, 32], strides = [1, 1]} : vector<2x128xf32> to vector<2x32xf32>
    %112 = arith.negf %111 : vector<2x32xf32>
    %113 = math.exp %112 : vector<2x32xf32>
    %cst_40 = arith.constant 1.000000e+00 : f32
    %114 = vector.broadcast %cst_40 : f32 to vector<2x32xf32>
    %115 = arith.addf %114, %113 : vector<2x32xf32>
    %116 = arith.divf %114, %115 : vector<2x32xf32>
    %117 = arith.mulf %108, %86 : vector<2x32xf32>
    %118 = arith.mulf %102, %110 : vector<2x32xf32>
    %119 = arith.addf %117, %118 : vector<2x32xf32>
    %120 = math.tanh %119 : vector<2x32xf32>
    %121 = arith.mulf %116, %120 : vector<2x32xf32>
    %c0_41 = arith.constant 0 : index
    %c2 = arith.constant 2 : index
    %c0_42 = arith.constant 0 : index
    %122 = vector.load %arg7[%c0_41, %c2, %c0_42] : memref<2x8x32xf32, #tpu.memory_space<vmem>>, vector<2x1x32xf32>
    %123 = vector.shape_cast %122 : vector<2x1x32xf32> to vector<2x32xf32>
    %124 = vector.shape_cast %121 : vector<2x32xf32> to vector<2x1x32xf32>
    tpu.vector_store %arg7[%c0_41, %c2, %c0_42], %124 {strides = array<i32>} : memref<2x8x32xf32, #tpu.memory_space<vmem>>, vector<2x1x32xf32>,
    %125 = vector.extract_strided_slice %23 {offsets = [0, 3, 0], sizes = [2, 1, 128], strides = [1, 1, 1]} : vector<2x8x128xf32> to vector<2x1x128xf32>
    %126 = vector.shape_cast %125 : vector<2x1x128xf32> to vector<2x128xf32>
    %c0_43 = arith.constant 0 : index
    %c0_44 = arith.constant 0 : index
    %127 = vector.load %arg5[%c0_43, %c0_44] : memref<32x128xf32, #tpu.memory_space<vmem>>, vector<32x128xf32>
    %cst_45 = arith.constant dense<0.000000e+00> : vector<2x128xf32>
    %128 = tpu.matmul %121, %127, %cst_45 {dimension_numbers = #tpu.dot_dimension_numbers<[1], [0], [0], [1], [0, 0, 1, 1], [], []>} : vector<2x32xf32>, vector<32x128xf32>, vector<2x128xf32> -> vector<2x128xf32>
    %129 = arith.addf %126, %128 : vector<2x128xf32>
    %130 = vector.extract_strided_slice %129 {offsets = [0, 0], sizes = [2, 32], strides = [1, 1]} : vector<2x128xf32> to vector<2x32xf32>
    %131 = arith.negf %130 : vector<2x32xf32>
    %132 = math.exp %131 : vector<2x32xf32>
    %cst_46 = arith.constant 1.000000e+00 : f32
    %133 = vector.broadcast %cst_46 : f32 to vector<2x32xf32>
    %134 = arith.addf %133, %132 : vector<2x32xf32>
    %135 = arith.divf %133, %134 : vector<2x32xf32>
    %136 = vector.extract_strided_slice %129 {offsets = [0, 32], sizes = [2, 32], strides = [1, 1]} : vector<2x128xf32> to vector<2x32xf32>
    %137 = arith.negf %136 : vector<2x32xf32>
    %138 = math.exp %137 : vector<2x32xf32>
    %cst_47 = arith.constant 1.000000e+00 : f32
    %139 = vector.broadcast %cst_47 : f32 to vector<2x32xf32>
    %140 = arith.addf %139, %138 : vector<2x32xf32>
    %141 = arith.divf %139, %140 : vector<2x32xf32>
    %142 = vector.extract_strided_slice %129 {offsets = [0, 64], sizes = [2, 32], strides = [1, 1]} : vector<2x128xf32> to vector<2x32xf32>
    %143 = math.tanh %142 : vector<2x32xf32>
    %144 = vector.extract_strided_slice %129 {offsets = [0, 96], sizes = [2, 32], strides = [1, 1]} : vector<2x128xf32> to vector<2x32xf32>
    %145 = arith.negf %144 : vector<2x32xf32>
    %146 = math.exp %145 : vector<2x32xf32>
    %cst_48 = arith.constant 1.000000e+00 : f32
    %147 = vector.broadcast %cst_48 : f32 to vector<2x32xf32>
    %148 = arith.addf %147, %146 : vector<2x32xf32>
    %149 = arith.divf %147, %148 : vector<2x32xf32>
    %150 = arith.mulf %141, %119 : vector<2x32xf32>
    %151 = arith.mulf %135, %143 : vector<2x32xf32>
    %152 = arith.addf %150, %151 : vector<2x32xf32>
    %153 = math.tanh %152 : vector<2x32xf32>
    %154 = arith.mulf %149, %153 : vector<2x32xf32>
    %c0_49 = arith.constant 0 : index
    %c3 = arith.constant 3 : index
    %c0_50 = arith.constant 0 : index
    %155 = vector.load %arg7[%c0_49, %c3, %c0_50] : memref<2x8x32xf32, #tpu.memory_space<vmem>>, vector<2x1x32xf32>
    %156 = vector.shape_cast %155 : vector<2x1x32xf32> to vector<2x32xf32>
    %157 = vector.shape_cast %154 : vector<2x32xf32> to vector<2x1x32xf32>
    tpu.vector_store %arg7[%c0_49, %c3, %c0_50], %157 {strides = array<i32>} : memref<2x8x32xf32, #tpu.memory_space<vmem>>, vector<2x1x32xf32>,
    %158 = vector.extract_strided_slice %23 {offsets = [0, 4, 0], sizes = [2, 1, 128], strides = [1, 1, 1]} : vector<2x8x128xf32> to vector<2x1x128xf32>
    %159 = vector.shape_cast %158 : vector<2x1x128xf32> to vector<2x128xf32>
    %c0_51 = arith.constant 0 : index
    %c0_52 = arith.constant 0 : index
    %160 = vector.load %arg5[%c0_51, %c0_52] : memref<32x128xf32, #tpu.memory_space<vmem>>, vector<32x128xf32>
    %cst_53 = arith.constant dense<0.000000e+00> : vector<2x128xf32>
    %161 = tpu.matmul %154, %160, %cst_53 {dimension_numbers = #tpu.dot_dimension_numbers<[1], [0], [0], [1], [0, 0, 1, 1], [], []>} : vector<2x32xf32>, vector<32x128xf32>, vector<2x128xf32> -> vector<2x128xf32>
    %162 = arith.addf %159, %161 : vector<2x128xf32>
    %163 = vector.extract_strided_slice %162 {offsets = [0, 0], sizes = [2, 32], strides = [1, 1]} : vector<2x128xf32> to vector<2x32xf32>
    %164 = arith.negf %163 : vector<2x32xf32>
    %165 = math.exp %164 : vector<2x32xf32>
    %cst_54 = arith.constant 1.000000e+00 : f32
    %166 = vector.broadcast %cst_54 : f32 to vector<2x32xf32>
    %167 = arith.addf %166, %165 : vector<2x32xf32>
    %168 = arith.divf %166, %167 : vector<2x32xf32>
    %169 = vector.extract_strided_slice %162 {offsets = [0, 32], sizes = [2, 32], strides = [1, 1]} : vector<2x128xf32> to vector<2x32xf32>
    %170 = arith.negf %169 : vector<2x32xf32>
    %171 = math.exp %170 : vector<2x32xf32>
    %cst_55 = arith.constant 1.000000e+00 : f32
    %172 = vector.broadcast %cst_55 : f32 to vector<2x32xf32>
    %173 = arith.addf %172, %171 : vector<2x32xf32>
    %174 = arith.divf %172, %173 : vector<2x32xf32>
    %175 = vector.extract_strided_slice %162 {offsets = [0, 64], sizes = [2, 32], strides = [1, 1]} : vector<2x128xf32> to vector<2x32xf32>
    %176 = math.tanh %175 : vector<2x32xf32>
    %177 = vector.extract_strided_slice %162 {offsets = [0, 96], sizes = [2, 32], strides = [1, 1]} : vector<2x128xf32> to vector<2x32xf32>
    %178 = arith.negf %177 : vector<2x32xf32>
    %179 = math.exp %178 : vector<2x32xf32>
    %cst_56 = arith.constant 1.000000e+00 : f32
    %180 = vector.broadcast %cst_56 : f32 to vector<2x32xf32>
    %181 = arith.addf %180, %179 : vector<2x32xf32>
    %182 = arith.divf %180, %181 : vector<2x32xf32>
    %183 = arith.mulf %174, %152 : vector<2x32xf32>
    %184 = arith.mulf %168, %176 : vector<2x32xf32>
    %185 = arith.addf %183, %184 : vector<2x32xf32>
    %186 = math.tanh %185 : vector<2x32xf32>
    %187 = arith.mulf %182, %186 : vector<2x32xf32>
    %c0_57 = arith.constant 0 : index
    %c4 = arith.constant 4 : index
    %c0_58 = arith.constant 0 : index
    %188 = vector.load %arg7[%c0_57, %c4, %c0_58] : memref<2x8x32xf32, #tpu.memory_space<vmem>>, vector<2x1x32xf32>
    %189 = vector.shape_cast %188 : vector<2x1x32xf32> to vector<2x32xf32>
    %190 = vector.shape_cast %187 : vector<2x32xf32> to vector<2x1x32xf32>
    tpu.vector_store %arg7[%c0_57, %c4, %c0_58], %190 {strides = array<i32>} : memref<2x8x32xf32, #tpu.memory_space<vmem>>, vector<2x1x32xf32>,
    %191 = vector.extract_strided_slice %23 {offsets = [0, 5, 0], sizes = [2, 1, 128], strides = [1, 1, 1]} : vector<2x8x128xf32> to vector<2x1x128xf32>
    %192 = vector.shape_cast %191 : vector<2x1x128xf32> to vector<2x128xf32>
    %c0_59 = arith.constant 0 : index
    %c0_60 = arith.constant 0 : index
    %193 = vector.load %arg5[%c0_59, %c0_60] : memref<32x128xf32, #tpu.memory_space<vmem>>, vector<32x128xf32>
    %cst_61 = arith.constant dense<0.000000e+00> : vector<2x128xf32>
    %194 = tpu.matmul %187, %193, %cst_61 {dimension_numbers = #tpu.dot_dimension_numbers<[1], [0], [0], [1], [0, 0, 1, 1], [], []>} : vector<2x32xf32>, vector<32x128xf32>, vector<2x128xf32> -> vector<2x128xf32>
    %195 = arith.addf %192, %194 : vector<2x128xf32>
    %196 = vector.extract_strided_slice %195 {offsets = [0, 0], sizes = [2, 32], strides = [1, 1]} : vector<2x128xf32> to vector<2x32xf32>
    %197 = arith.negf %196 : vector<2x32xf32>
    %198 = math.exp %197 : vector<2x32xf32>
    %cst_62 = arith.constant 1.000000e+00 : f32
    %199 = vector.broadcast %cst_62 : f32 to vector<2x32xf32>
    %200 = arith.addf %199, %198 : vector<2x32xf32>
    %201 = arith.divf %199, %200 : vector<2x32xf32>
    %202 = vector.extract_strided_slice %195 {offsets = [0, 32], sizes = [2, 32], strides = [1, 1]} : vector<2x128xf32> to vector<2x32xf32>
    %203 = arith.negf %202 : vector<2x32xf32>
    %204 = math.exp %203 : vector<2x32xf32>
    %cst_63 = arith.constant 1.000000e+00 : f32
    %205 = vector.broadcast %cst_63 : f32 to vector<2x32xf32>
    %206 = arith.addf %205, %204 : vector<2x32xf32>
    %207 = arith.divf %205, %206 : vector<2x32xf32>
    %208 = vector.extract_strided_slice %195 {offsets = [0, 64], sizes = [2, 32], strides = [1, 1]} : vector<2x128xf32> to vector<2x32xf32>
    %209 = math.tanh %208 : vector<2x32xf32>
    %210 = vector.extract_strided_slice %195 {offsets = [0, 96], sizes = [2, 32], strides = [1, 1]} : vector<2x128xf32> to vector<2x32xf32>
    %211 = arith.negf %210 : vector<2x32xf32>
    %212 = math.exp %211 : vector<2x32xf32>
    %cst_64 = arith.constant 1.000000e+00 : f32
    %213 = vector.broadcast %cst_64 : f32 to vector<2x32xf32>
    %214 = arith.addf %213, %212 : vector<2x32xf32>
    %215 = arith.divf %213, %214 : vector<2x32xf32>
    %216 = arith.mulf %207, %185 : vector<2x32xf32>
    %217 = arith.mulf %201, %209 : vector<2x32xf32>
    %218 = arith.addf %216, %217 : vector<2x32xf32>
    %219 = math.tanh %218 : vector<2x32xf32>
    %220 = arith.mulf %215, %219 : vector<2x32xf32>
    %c0_65 = arith.constant 0 : index
    %c5 = arith.constant 5 : index
    %c0_66 = arith.constant 0 : index
    %221 = vector.load %arg7[%c0_65, %c5, %c0_66] : memref<2x8x32xf32, #tpu.memory_space<vmem>>, vector<2x1x32xf32>
    %222 = vector.shape_cast %221 : vector<2x1x32xf32> to vector<2x32xf32>
    %223 = vector.shape_cast %220 : vector<2x32xf32> to vector<2x1x32xf32>
    tpu.vector_store %arg7[%c0_65, %c5, %c0_66], %223 {strides = array<i32>} : memref<2x8x32xf32, #tpu.memory_space<vmem>>, vector<2x1x32xf32>,
    %224 = vector.extract_strided_slice %23 {offsets = [0, 6, 0], sizes = [2, 1, 128], strides = [1, 1, 1]} : vector<2x8x128xf32> to vector<2x1x128xf32>
    %225 = vector.shape_cast %224 : vector<2x1x128xf32> to vector<2x128xf32>
    %c0_67 = arith.constant 0 : index
    %c0_68 = arith.constant 0 : index
    %226 = vector.load %arg5[%c0_67, %c0_68] : memref<32x128xf32, #tpu.memory_space<vmem>>, vector<32x128xf32>
    %cst_69 = arith.constant dense<0.000000e+00> : vector<2x128xf32>
    %227 = tpu.matmul %220, %226, %cst_69 {dimension_numbers = #tpu.dot_dimension_numbers<[1], [0], [0], [1], [0, 0, 1, 1], [], []>} : vector<2x32xf32>, vector<32x128xf32>, vector<2x128xf32> -> vector<2x128xf32>
    %228 = arith.addf %225, %227 : vector<2x128xf32>
    %229 = vector.extract_strided_slice %228 {offsets = [0, 0], sizes = [2, 32], strides = [1, 1]} : vector<2x128xf32> to vector<2x32xf32>
    %230 = arith.negf %229 : vector<2x32xf32>
    %231 = math.exp %230 : vector<2x32xf32>
    %cst_70 = arith.constant 1.000000e+00 : f32
    %232 = vector.broadcast %cst_70 : f32 to vector<2x32xf32>
    %233 = arith.addf %232, %231 : vector<2x32xf32>
    %234 = arith.divf %232, %233 : vector<2x32xf32>
    %235 = vector.extract_strided_slice %228 {offsets = [0, 32], sizes = [2, 32], strides = [1, 1]} : vector<2x128xf32> to vector<2x32xf32>
    %236 = arith.negf %235 : vector<2x32xf32>
    %237 = math.exp %236 : vector<2x32xf32>
    %cst_71 = arith.constant 1.000000e+00 : f32
    %238 = vector.broadcast %cst_71 : f32 to vector<2x32xf32>
    %239 = arith.addf %238, %237 : vector<2x32xf32>
    %240 = arith.divf %238, %239 : vector<2x32xf32>
    %241 = vector.extract_strided_slice %228 {offsets = [0, 64], sizes = [2, 32], strides = [1, 1]} : vector<2x128xf32> to vector<2x32xf32>
    %242 = math.tanh %241 : vector<2x32xf32>
    %243 = vector.extract_strided_slice %228 {offsets = [0, 96], sizes = [2, 32], strides = [1, 1]} : vector<2x128xf32> to vector<2x32xf32>
    %244 = arith.negf %243 : vector<2x32xf32>
    %245 = math.exp %244 : vector<2x32xf32>
    %cst_72 = arith.constant 1.000000e+00 : f32
    %246 = vector.broadcast %cst_72 : f32 to vector<2x32xf32>
    %247 = arith.addf %246, %245 : vector<2x32xf32>
    %248 = arith.divf %246, %247 : vector<2x32xf32>
    %249 = arith.mulf %240, %218 : vector<2x32xf32>
    %250 = arith.mulf %234, %242 : vector<2x32xf32>
    %251 = arith.addf %249, %250 : vector<2x32xf32>
    %252 = math.tanh %251 : vector<2x32xf32>
    %253 = arith.mulf %248, %252 : vector<2x32xf32>
    %c0_73 = arith.constant 0 : index
    %c6 = arith.constant 6 : index
    %c0_74 = arith.constant 0 : index
    %254 = vector.load %arg7[%c0_73, %c6, %c0_74] : memref<2x8x32xf32, #tpu.memory_space<vmem>>, vector<2x1x32xf32>
    %255 = vector.shape_cast %254 : vector<2x1x32xf32> to vector<2x32xf32>
    %256 = vector.shape_cast %253 : vector<2x32xf32> to vector<2x1x32xf32>
    tpu.vector_store %arg7[%c0_73, %c6, %c0_74], %256 {strides = array<i32>} : memref<2x8x32xf32, #tpu.memory_space<vmem>>, vector<2x1x32xf32>,
    %257 = vector.extract_strided_slice %23 {offsets = [0, 7, 0], sizes = [2, 1, 128], strides = [1, 1, 1]} : vector<2x8x128xf32> to vector<2x1x128xf32>
    %258 = vector.shape_cast %257 : vector<2x1x128xf32> to vector<2x128xf32>
    %c0_75 = arith.constant 0 : index
    %c0_76 = arith.constant 0 : index
    %259 = vector.load %arg5[%c0_75, %c0_76] : memref<32x128xf32, #tpu.memory_space<vmem>>, vector<32x128xf32>
    %cst_77 = arith.constant dense<0.000000e+00> : vector<2x128xf32>
    %260 = tpu.matmul %253, %259, %cst_77 {dimension_numbers = #tpu.dot_dimension_numbers<[1], [0], [0], [1], [0, 0, 1, 1], [], []>} : vector<2x32xf32>, vector<32x128xf32>, vector<2x128xf32> -> vector<2x128xf32>
    %261 = arith.addf %258, %260 : vector<2x128xf32>
    %262 = vector.extract_strided_slice %261 {offsets = [0, 0], sizes = [2, 32], strides = [1, 1]} : vector<2x128xf32> to vector<2x32xf32>
    %263 = arith.negf %262 : vector<2x32xf32>
    %264 = math.exp %263 : vector<2x32xf32>
    %cst_78 = arith.constant 1.000000e+00 : f32
    %265 = vector.broadcast %cst_78 : f32 to vector<2x32xf32>
    %266 = arith.addf %265, %264 : vector<2x32xf32>
    %267 = arith.divf %265, %266 : vector<2x32xf32>
    %268 = vector.extract_strided_slice %261 {offsets = [0, 32], sizes = [2, 32], strides = [1, 1]} : vector<2x128xf32> to vector<2x32xf32>
    %269 = arith.negf %268 : vector<2x32xf32>
    %270 = math.exp %269 : vector<2x32xf32>
    %cst_79 = arith.constant 1.000000e+00 : f32
    %271 = vector.broadcast %cst_79 : f32 to vector<2x32xf32>
    %272 = arith.addf %271, %270 : vector<2x32xf32>
    %273 = arith.divf %271, %272 : vector<2x32xf32>
    %274 = vector.extract_strided_slice %261 {offsets = [0, 64], sizes = [2, 32], strides = [1, 1]} : vector<2x128xf32> to vector<2x32xf32>
    %275 = math.tanh %274 : vector<2x32xf32>
    %276 = vector.extract_strided_slice %261 {offsets = [0, 96], sizes = [2, 32], strides = [1, 1]} : vector<2x128xf32> to vector<2x32xf32>
    %277 = arith.negf %276 : vector<2x32xf32>
    %278 = math.exp %277 : vector<2x32xf32>
    %cst_80 = arith.constant 1.000000e+00 : f32
    %279 = vector.broadcast %cst_80 : f32 to vector<2x32xf32>
    %280 = arith.addf %279, %278 : vector<2x32xf32>
    %281 = arith.divf %279, %280 : vector<2x32xf32>
    %282 = arith.mulf %273, %251 : vector<2x32xf32>
    %283 = arith.mulf %267, %275 : vector<2x32xf32>
    %284 = arith.addf %282, %283 : vector<2x32xf32>
    %285 = math.tanh %284 : vector<2x32xf32>
    %286 = arith.mulf %281, %285 : vector<2x32xf32>
    %c0_81 = arith.constant 0 : index
    %c7 = arith.constant 7 : index
    %c0_82 = arith.constant 0 : index
    %287 = vector.load %arg7[%c0_81, %c7, %c0_82] : memref<2x8x32xf32, #tpu.memory_space<vmem>>, vector<2x1x32xf32>
    %288 = vector.shape_cast %287 : vector<2x1x32xf32> to vector<2x32xf32>
    %289 = vector.shape_cast %286 : vector<2x32xf32> to vector<2x1x32xf32>
    tpu.vector_store %arg7[%c0_81, %c7, %c0_82], %289 {strides = array<i32>} : memref<2x8x32xf32, #tpu.memory_space<vmem>>, vector<2x1x32xf32>,
    %c0_83 = arith.constant 0 : index
    %c0_84 = arith.constant 0 : index
    %290 = vector.load %arg8[%c0_83, %c0_84] : memref<2x32xf32, #tpu.memory_space<vmem>>, vector<2x32xf32>
    tpu.vector_store %arg8[%c0_83, %c0_84], %286 {strides = array<i32>} : memref<2x32xf32, #tpu.memory_space<vmem>>, vector<2x32xf32>,
    %c0_85 = arith.constant 0 : index
    %c0_86 = arith.constant 0 : index
    %291 = vector.load %arg9[%c0_85, %c0_86] : memref<2x32xf32, #tpu.memory_space<vmem>>, vector<2x32xf32>
    tpu.vector_store %arg9[%c0_85, %c0_86], %284 {strides = array<i32>} : memref<2x32xf32, #tpu.memory_space<vmem>>, vector<2x32xf32>,
    return
  }
  func.func @transform_0(%arg0: i32) -> (i32, i32, i32) {
    %c0_i32 = arith.constant 0 : i32
    %c0_i32_0 = arith.constant 0 : i32
    %c0_i32_1 = arith.constant 0 : i32
    return %c0_i32, %arg0, %c0_i32_0 : i32, i32, i32
  }
  func.func @transform_1(%arg0: i32) -> (i32, i32, i32) {
    %c0_i32 = arith.constant 0 : i32
    %c0_i32_0 = arith.constant 0 : i32
    %c0_i32_1 = arith.constant 0 : i32
    return %c0_i32, %arg0, %c0_i32_0 : i32, i32, i32
  }
  func.func @transform_2(%arg0: i32) -> (i32, i32) {
    %c0_i32 = arith.constant 0 : i32
    %c0_i32_0 = arith.constant 0 : i32
    %c0_i32_1 = arith.constant 0 : i32
    return %c0_i32, %c0_i32_0 : i32, i32
  }
  func.func @transform_3(%arg0: i32) -> (i32, i32) {
    %c0_i32 = arith.constant 0 : i32
    %c0_i32_0 = arith.constant 0 : i32
    %c0_i32_1 = arith.constant 0 : i32
    return %c0_i32, %c0_i32_0 : i32, i32
  }
  func.func @transform_4(%arg0: i32) -> (i32, i32) {
    %c0_i32 = arith.constant 0 : i32
    %c0_i32_0 = arith.constant 0 : i32
    %c0_i32_1 = arith.constant 0 : i32
    return %c0_i32, %c0_i32_0 : i32, i32
  }
  func.func @transform_5(%arg0: i32) -> (i32, i32) {
    %c0_i32 = arith.constant 0 : i32
    %c0_i32_0 = arith.constant 0 : i32
    %c0_i32_1 = arith.constant 0 : i32
    return %c0_i32, %c0_i32_0 : i32, i32
  }
  func.func @transform_6(%arg0: i32) -> (i32, i32, i32) {
    %c0_i32 = arith.constant 0 : i32
    %c0_i32_0 = arith.constant 0 : i32
    %c0_i32_1 = arith.constant 0 : i32
    return %c0_i32, %arg0, %c0_i32_0 : i32, i32, i32
  }
}

</mosaic_0001>

<llo_original>
// kernel: tpu_custom_call.1
$region0: #{tpu_custom_call.1}
  #allocation0 [shape = 'u32[]', space=smem, size = 0x4, offset = 0x4, fixed_abs, tag = 'smem constant byte address 0x4 - core index']
  #allocation1 [shape = 'u32[72,128]{1,0:T(1,128)}', space=vmem, size = 0x9000, scoped, tag = 'internal scratch']
  #allocation2 [shape = 'f32[2,32]{1,0:T(2,128)}', space=vmem, size = 0x400, scoped, tag = 'scratch operand']
  #allocation3 [shape = 'f32[2,32]{1,0:T(2,128)}', space=vmem, size = 0x400, scoped, tag = 'scratch operand']
  %s0 = inlined_call_operand.vmem [shape: f32[2,8,32], index: 0, kind: input, shape index: {}]
  %s1 = inlined_call_operand.vmem [shape: s32[2,8,1], index: 1, kind: input, shape index: {}]
  %s2 = inlined_call_operand.vmem [shape: f32[2,32], index: 2, kind: input, shape index: {}]
  %s3 = inlined_call_operand.hbm [shape: f32[32,128], index: 3, kind: input, shape index: {}]
  %s4 = inlined_call_operand.hbm [shape: f32[32,128], index: 4, kind: input, shape index: {}]
  %s5 = inlined_call_operand.vmem [shape: f32[1,128], index: 5, kind: input, shape index: {}]
  %s6 = inlined_call_operand.hbm [shape: f32[2,8,32], index: 6, kind: output, shape index: {}]
  %s7 = sld [smem:[#allocation0]]
  $region46: #{tpu_custom_call.1} parent=0
    _
  %s9 = ssub.s32 1, %s7
  %s10 = scalar_select 0, %s9, %s7
  $region1: #{tpu_custom_call.1} parent=0
    #allocation4 [shape = 'u8[16384]{0}', space=vmem, size = 0x4000, scoped, tag = 'input window, operand 3, single buffered']
    #allocation5 [shape = 's32[1]{0}', space=sflag, size = 0x4, scoped, tag = 'scoped memory for tpu_custom_call.1']
    #allocation6 [shape = 's32[1]{0}', space=sflag, size = 0x4, scoped, tag = 'scoped memory for tpu_custom_call.1']
    #allocation7 [shape = 'u8[16384]{0}', space=vmem, size = 0x4000, scoped, tag = 'input window, operand 4, single buffered']
    #allocation8 [shape = 's32[1]{0}', space=sflag, size = 0x4, scoped, tag = 'scoped memory for tpu_custom_call.1']
    #allocation9 [shape = 'u8[8192]{0}', space=vmem, size = 0x2000, scoped, tag = 'output window, operand 0, single buffered']
    %11 = vsyncpa [#allocation5], 0
    %12 = vsyncpa [#allocation8], 0
    %13 = vsyncpa [#allocation6], 0
    // Predicated region
    $region2: #{tpu_custom_call.1} parent=1 // pred_check
      _
    $region3: #{tpu_custom_call.1} parent=1 // pred_check_branch
      %15 = sbr.rel (0) target = $region5
    $region4: #{tpu_custom_call.1} parent=1 // pred_region
      _
    $region5: #{tpu_custom_call.1} parent=1 // pred_fallthru
      _
    // Predicated region
    $region6: #{tpu_custom_call.1} parent=1 // pred_check
      _
    $region7: #{tpu_custom_call.1} parent=1 // pred_check_branch
      %17 = sbr.rel (0) target = $region9
    $region8: #{tpu_custom_call.1} parent=1 // pred_region
      _
    $region9: #{tpu_custom_call.1} parent=1 // pred_fallthru
      _
    // Predicated region
    $region10: #{tpu_custom_call.1} parent=1 // pred_check
      _
    $region11: #{tpu_custom_call.1} parent=1 // pred_check_branch
      %19 = sbr.rel (0) target = $region13
    $region12: #{tpu_custom_call.1} parent=1 // pred_region
      _
    $region13: #{tpu_custom_call.1} parent=1 // pred_fallthru
      _
    // Predicated region
    $region14: #{tpu_custom_call.1} parent=1 // pred_check
      _
    $region15: #{tpu_custom_call.1} parent=1 // pred_check_branch
      %21 = sbr.rel (0) target = $region17
    $region16: #{tpu_custom_call.1} parent=1 // pred_region
      %23 = vsyncadd [#allocation5], 0
      %s24 = sshll.u32 %s3, 4
      %s25 = int_to_ptr.hbm [resolvable:$true] %s24
      %s26 = sshll.u32 [#allocation4], 4
      %s27 = int_to_ptr.vmem [resolvable:$true] %s26
      %32 = dma.hbm_to_vmem [thread:$0]  %s25, 512, %s27, [#allocation5], 128, 128, 8
    $region17: #{tpu_custom_call.1} parent=1 // pred_fallthru
      _
    // Predicated region
    $region18: #{tpu_custom_call.1} parent=1 // pred_check
      _
    $region19: #{tpu_custom_call.1} parent=1 // pred_check_branch
      %34 = sbr.rel (0) target = $region21
    $region20: #{tpu_custom_call.1} parent=1 // pred_region
      %36 = vsyncadd [#allocation8], 0
      %s37 = sshll.u32 %s4, 4
      %s38 = int_to_ptr.hbm [resolvable:$true] %s37
      %s39 = sshll.u32 [#allocation7], 4
      %s40 = int_to_ptr.vmem [resolvable:$true] %s39
      %45 = dma.hbm_to_vmem [thread:$0]  %s38, 512, %s40, [#allocation8], 128, 128, 8
    $region21: #{tpu_custom_call.1} parent=1 // pred_fallthru
      _
    // Predicated region
    $region22: #{tpu_custom_call.1} parent=1 // pred_check
      _
    $region23: #{tpu_custom_call.1} parent=1 // pred_check_branch
      %47 = sbr.rel (0) target = $region25
    $region24: #{tpu_custom_call.1} parent=1 // pred_region
      _
    $region25: #{tpu_custom_call.1} parent=1 // pred_fallthru
      _
    // Predicated region
    $region26: #{tpu_custom_call.1} parent=1 // pred_check
      _
    $region27: #{tpu_custom_call.1} parent=1 // pred_check_branch
      %49 = sbr.rel (0) target = $region29
    $region28: #{tpu_custom_call.1} parent=1 // pred_region
      %51 = dma.done [#allocation5], 512
    $region29: #{tpu_custom_call.1} parent=1 // pred_fallthru
      _
    // Predicated region
    $region30: #{tpu_custom_call.1} parent=1 // pred_check
      _
    $region31: #{tpu_custom_call.1} parent=1 // pred_check_branch
      %53 = sbr.rel (0) target = $region33
    $region32: #{tpu_custom_call.1} parent=1 // pred_region
      %55 = dma.done [#allocation8], 512
    $region33: #{tpu_custom_call.1} parent=1 // pred_fallthru
      _
    %p56 = scmp.eq.s32.totalorder 0, 0
    // Predicated region
    $region34: #{tpu_custom_call.1} parent=1 // pred_check
      %p57 = pneg %p56
    $region35: #{tpu_custom_call.1} parent=1 // pred_check_branch
      %59 = sbr.rel (%p57) target = $region37
    $region36: #{tpu_custom_call.1} parent=1 // pred_region
      %vm60 = vcmask 254976
      %61 = vst.msk [vmem:[#allocation2] sm:$0x3] %vm60, 0.0
      %62 = vst.msk [vmem:[#allocation3] sm:$0x3] %vm60, 0.0
    $region37: #{tpu_custom_call.1} parent=1 // pred_fallthru
      _
    %v63 = vld [vmem:[%s1] sm:$0xff]
    %v64 = vld [vmem:[%s1 + $0x8] sm:$0xff]
    %v65 = vcvt.s32.f32 %v63
    %v66 = vcvt.s32.f32 %v64
    %v67 = vld [vmem:[%s2] sm:$0x1]
    %v68 = vld [vmem:[%s2 + $0x1] sm:$0x1]
    %v69 = vld [vmem:[%s0] sm:$0xff]
    %v70 = vld [vmem:[%s0 + $0x8] sm:$0xff]
    %v71 = vperm.slane %v67, 0
    %v72 = vadd.f32 %v69, %v71
    %v73 = vadd.f32 %v70, %v71
    %v74 = vsub.f32 %v68, %v67
    %76 = vset.pattern.permute.xlu0 0
    %77 = vperm.xlu0 %76, %v65
    %v78 = vpop.permute.xlu0 %77
    %81 = vset.pattern.permute.xlu0 0
    %82 = vperm.xlu0 %81, %v66
    %v83 = vpop.permute.xlu0 %82
    %v85 = vperm.slane %v74, 0
    %v86 = vmul.f32 %v78, %v85
    %v87 = vmul.f32 %v83, %v85
    %v88 = vadd.f32 %v72, %v86
    %v89 = vadd.f32 %v73, %v87
    %v90 = vld [vmem:[#allocation4] sm:$0xff]
    %v91 = vld [vmem:[#allocation4 + $0x8] sm:$0xff]
    %v92 = vld [vmem:[#allocation4 + $0x10] sm:$0xff]
    %v93 = vld [vmem:[#allocation4 + $0x18] sm:$0xff]
    %v94 = vld [vmem:[%s5] sm:$0x1]
    %v96 = vperm.slane %v94, 0
    %vm98 = vcmask 261120
    %v100 = vsel %vm98, %v88, 0
    %v103 = vsel %vm98, %v89, 0
    %105 = vmatpush.msra.mxu0 0.0
    %106 = vmatpush.msra.mxu0 0.0
    %107 = vmatpush.msra.mxu0 0.0
    %108 = vmatpush.msra.mxu0 0.0
    %109 = vmatpush.msra.mxu0 0.0
    %110 = vmatpush.msra.mxu0 0.0
    %111 = vmatpush.msra.mxu0 0.0
    %112 = vmatpush.msra.mxu0 0.0
    %113 = vmatpush.msra.mxu0 0.0
    %114 = vmatpush.msra.mxu0 0.0
    %115 = vmatpush.msra.mxu0 0.0
    %116 = vmatpush.msra.mxu0 0.0
    %117 = vmatpush.msra.mxu0 %v93
    %118 = vmatpush.msra.mxu0 %v92
    %119 = vmatpush.msra.mxu0 %v91
    %120 = vmatpush.msra.mxu0 %v90
    %121 = vmatmul.f32.gmra.mxu0 %v100
    %v122 = vpop.f32.mrf.mxu0
    %v123 = vadd.f32 %v96, %v122
    %124 = vmatmul.f32.gmra.mxu0 %v103
    %v125 = vpop.f32.mrf.mxu0
    %v126 = vadd.f32 %v96, %v125
    %127 = vdwg.mxu0
    %v128 = vld [vmem:[#allocation2] sm:$0x3]
    %v129 = vld [vmem:[#allocation3] sm:$0x3]
    %v130 = vld [vmem:[#allocation7] sm:$0xff]
    %v131 = vld [vmem:[#allocation7 + $0x8] sm:$0xff]
    %v132 = vld [vmem:[#allocation7 + $0x10] sm:$0xff]
    %v133 = vld [vmem:[#allocation7 + $0x18] sm:$0xff]
    %v135 = vsel %vm98, %v128, 0
    %137 = vmatpush.msra.mxu0 0.0
    %138 = vmatpush.msra.mxu0 0.0
    %139 = vmatpush.msra.mxu0 0.0
    %140 = vmatpush.msra.mxu0 0.0
    %141 = vmatpush.msra.mxu0 0.0
    %142 = vmatpush.msra.mxu0 0.0
    %143 = vmatpush.msra.mxu0 0.0
    %144 = vmatpush.msra.mxu0 0.0
    %145 = vmatpush.msra.mxu0 0.0
    %146 = vmatpush.msra.mxu0 0.0
    %147 = vmatpush.msra.mxu0 0.0
    %148 = vmatpush.msra.mxu0 0.0
    %149 = vmatpush.msra.mxu0 %v133
    %150 = vmatpush.msra.mxu0 %v132
    %151 = vmatpush.msra.mxu0 %v131
    %152 = vmatpush.msra.mxu0 %v130
    %153 = vmatmul.f32.gmra.mxu0 %v135
    %v154 = vpop.f32.mrf.mxu0
    %v155 = vadd.f32 0.0, %v154
    %156 = vdwg.mxu0
    %v158 = vrot.slane %v155, 1
    %v161 = vadd.f32 %v123, %v155
    %v162 = vadd.f32 %v126, %v158
    %v163 = vxor.u32 %v161, 2147483648
    %v164 = vxor.u32 %v162, 2147483648
    %v165 = vmul.f32 %v163, 1.442695
    %v166 = vpow.pop %v165
    %v167 = vmul.f32 %v164, 1.442695
    %v168 = vpow.pop %v167
    %v169 = vadd.f32 %v166, 1.0
    %v170 = vadd.f32 %v168, 1.0
    %v171 = vrcp.pop %v169
    %v172 = vmul.f32 %v169, %v171
    %v173 = vsub.f32 1.0, %v172
    %v174 = vmul.f32 %v171, %v173
    %v175 = vadd.f32 %v171, %v174
    %vm176 = vweird.f32 %v169
    %vm177 = vweird.f32 %v171
    %vm178 = vmor %vm176, %vm177
    %v179 = vsel %vm178, %v171, %v175
    %v180 = vand.u32 2147483647, %v169
    %vm181 = vcmp.eq.f32.partialorder %v180, 8.507059e+37
    %v182 = vand.u32 %v169, 2147483648
    %v183 = vor.u32 1.1754944e-38, %v182
    %v184 = vsel %vm181, %v183, %v179
    %v185 = vmul.f32 1.0, %v184
    %v186 = vrcp.pop %v170
    %v187 = vmul.f32 %v170, %v186
    %v188 = vsub.f32 1.0, %v187
    %v189 = vmul.f32 %v186, %v188
    %v190 = vadd.f32 %v186, %v189
    %vm191 = vweird.f32 %v170
    %vm192 = vweird.f32 %v186
    %vm193 = vmor %vm191, %vm192
    %v194 = vsel %vm193, %v186, %v190
    %v195 = vand.u32 2147483647, %v170
    %vm196 = vcmp.eq.f32.partialorder %v195, 8.507059e+37
    %v197 = vand.u32 %v170, 2147483648
    %v198 = vor.u32 1.1754944e-38, %v197
    %v199 = vsel %vm196, %v198, %v194
    %v200 = vmul.f32 1.0, %v199
    %v201 = vtanh.pop %v161
    %v202 = vtanh.pop %v162
    %v204 = vrot.slane %v129, 1
    %205 = vrot.lane.b32.xlu0 %v129, 32
    %v206 = vpop.permute.xlu0 %205
    %207 = vrot.lane.b32.xlu0 %v204, 32
    %v208 = vpop.permute.xlu0 %207
    %v211 = vmul.f32 %v185, %v206
    %v212 = vmul.f32 %v200, %v208
    %215 = vrot.lane.b32.xlu0 %v201, 64
    %v216 = vpop.permute.xlu0 %215
    %217 = vrot.lane.b32.xlu0 %v202, 64
    %v218 = vpop.permute.xlu0 %217
    %v221 = vmul.f32 %v185, %v216
    %v222 = vmul.f32 %v200, %v218
    %225 = vrot.lane.b32.xlu0 %v221, 32
    %v226 = vpop.permute.xlu0 %225
    %227 = vrot.lane.b32.xlu0 %v222, 32
    %v228 = vpop.permute.xlu0 %227
    %v231 = vadd.f32 %v211, %v226
    %v232 = vadd.f32 %v212, %v228
    %v233 = vtanh.pop %v231
    %v234 = vtanh.pop %v232
    %237 = vrot.lane.b32.xlu0 %v233, 64
    %v238 = vpop.permute.xlu0 %237
    %239 = vrot.lane.b32.xlu0 %v234, 64
    %v240 = vpop.permute.xlu0 %239
    %v243 = vmul.f32 %v185, %v238
    %v244 = vmul.f32 %v200, %v240
    %247 = vrot.lane.b32.xlu0 %v243, 32
    %v248 = vpop.permute.xlu0 %247
    %249 = vrot.lane.b32.xlu0 %v244, 32
    %v250 = vpop.permute.xlu0 %249
    %vm253 = vcmask 253952
    %254 = vst.msk [vmem:[#allocation9] sm:$0x1] %vm253, %v248
    %255 = vst.msk [vmem:[#allocation9 + $0x8] sm:$0x1] %vm253, %v250
    %v256 = vld [vmem:[#allocation7] sm:$0xff]
    %v257 = vld [vmem:[#allocation7 + $0x8] sm:$0xff]
    %v258 = vld [vmem:[#allocation7 + $0x10] sm:$0xff]
    %v259 = vld [vmem:[#allocation7 + $0x18] sm:$0xff]
    %v260 = vrot.slane %v244, 7
    %vm261 = vcmask 1041409
    %v262 = vsel %vm261, %v260, %v243
    %263 = vrot.lane.b32.xlu0 %v262, 32
    %v264 = vpop.permute.xlu0 %263
    %v265 = vsel %vm98, %v264, 0
    %267 = vmatpush.msra.mxu0 0.0
    %268 = vmatpush.msra.mxu0 0.0
    %269 = vmatpush.msra.mxu0 0.0
    %270 = vmatpush.msra.mxu0 0.0
    %271 = vmatpush.msra.mxu0 0.0
    %272 = vmatpush.msra.mxu0 0.0
    %273 = vmatpush.msra.mxu0 0.0
    %274 = vmatpush.msra.mxu0 0.0
    %275 = vmatpush.msra.mxu0 0.0
    %276 = vmatpush.msra.mxu0 0.0
    %277 = vmatpush.msra.mxu0 0.0
    %278 = vmatpush.msra.mxu0 0.0
    %279 = vmatpush.msra.mxu0 %v259
    %280 = vmatpush.msra.mxu0 %v258
    %281 = vmatpush.msra.mxu0 %v257
    %282 = vmatpush.msra.mxu0 %v256
    %283 = vmatmul.f32.gmra.mxu0 %v265
    %v284 = vpop.f32.mrf.mxu0
    %v285 = vadd.f32 0.0, %v284
    %286 = vdwg.mxu0
    %v288 = vrot.slane %v285, 7
    %v291 = vadd.f32 %v123, %v288
    %v292 = vadd.f32 %v126, %v285
    %v293 = vxor.u32 %v291, 2147483648
    %v294 = vxor.u32 %v292, 2147483648
    %v295 = vmul.f32 %v293, 1.442695
    %v296 = vpow.pop %v295
    %v297 = vmul.f32 %v294, 1.442695
    %v298 = vpow.pop %v297
    %v299 = vadd.f32 %v296, 1.0
    %v300 = vadd.f32 %v298, 1.0
    %v301 = vrcp.pop %v299
    %v302 = vmul.f32 %v299, %v301
    %v303 = vsub.f32 1.0, %v302
    %v304 = vmul.f32 %v301, %v303
    %v305 = vadd.f32 %v301, %v304
    %vm306 = vweird.f32 %v299
    %vm307 = vweird.f32 %v301
    %vm308 = vmor %vm306, %vm307
    %v309 = vsel %vm308, %v301, %v305
    %v310 = vand.u32 2147483647, %v299
    %vm311 = vcmp.eq.f32.partialorder %v310, 8.507059e+37
    %v312 = vand.u32 %v299, 2147483648
    %v313 = vor.u32 1.1754944e-38, %v312
    %v314 = vsel %vm311, %v313, %v309
    %v315 = vmul.f32 1.0, %v314
    %v316 = vrcp.pop %v300
    %v317 = vmul.f32 %v300, %v316
    %v318 = vsub.f32 1.0, %v317
    %v319 = vmul.f32 %v316, %v318
    %v320 = vadd.f32 %v316, %v319
    %vm321 = vweird.f32 %v300
    %vm322 = vweird.f32 %v316
    %vm323 = vmor %vm321, %vm322
    %v324 = vsel %vm323, %v316, %v320
    %v325 = vand.u32 2147483647, %v300
    %vm326 = vcmp.eq.f32.partialorder %v325, 8.507059e+37
    %v327 = vand.u32 %v300, 2147483648
    %v328 = vor.u32 1.1754944e-38, %v327
    %v329 = vsel %vm326, %v328, %v324
    %v330 = vmul.f32 1.0, %v329
    %v331 = vtanh.pop %v291
    %v332 = vtanh.pop %v292
    %v335 = vrot.slane %v231, 7
    %v336 = vrot.slane %v232, 7
    %v339 = vmul.f32 %v315, %v335
    %v340 = vmul.f32 %v330, %v336
    %343 = vrot.lane.b32.xlu0 %v331, 64
    %v344 = vpop.permute.xlu0 %343
    %345 = vrot.lane.b32.xlu0 %v332, 64
    %v346 = vpop.permute.xlu0 %345
    %v349 = vmul.f32 %v315, %v344
    %v350 = vmul.f32 %v330, %v346
    %353 = vrot.lane.b32.xlu0 %v349, 32
    %v354 = vpop.permute.xlu0 %353
    %355 = vrot.lane.b32.xlu0 %v350, 32
    %v356 = vpop.permute.xlu0 %355
    %v359 = vadd.f32 %v339, %v354
    %v360 = vadd.f32 %v340, %v356
    %v361 = vtanh.pop %v359
    %v362 = vtanh.pop %v360
    %365 = vrot.lane.b32.xlu0 %v361, 64
    %v366 = vpop.permute.xlu0 %365
    %367 = vrot.lane.b32.xlu0 %v362, 64
    %v368 = vpop.permute.xlu0 %367
    %v371 = vmul.f32 %v315, %v366
    %v372 = vmul.f32 %v330, %v368
    %375 = vrot.lane.b32.xlu0 %v371, 32
    %v376 = vpop.permute.xlu0 %375
    %377 = vrot.lane.b32.xlu0 %v372, 32
    %v378 = vpop.permute.xlu0 %377
    %vm381 = vcmask 254977
    %382 = vst.msk [vmem:[#allocation9] sm:$0x2] %vm381, %v376
    %383 = vst.msk [vmem:[#allocation9 + $0x8] sm:$0x2] %vm381, %v378
    %v384 = vld [vmem:[#allocation7] sm:$0xff]
    %v385 = vld [vmem:[#allocation7 + $0x8] sm:$0xff]
    %v386 = vld [vmem:[#allocation7 + $0x10] sm:$0xff]
    %v387 = vld [vmem:[#allocation7 + $0x18] sm:$0xff]
    %v388 = vrot.slane %v371, 1
    %v389 = vsel %vm261, %v372, %v388
    %390 = vrot.lane.b32.xlu0 %v389, 32
    %v391 = vpop.permute.xlu0 %390
    %v392 = vsel %vm98, %v391, 0
    %394 = vmatpush.msra.mxu0 0.0
    %395 = vmatpush.msra.mxu0 0.0
    %396 = vmatpush.msra.mxu0 0.0
    %397 = vmatpush.msra.mxu0 0.0
    %398 = vmatpush.msra.mxu0 0.0
    %399 = vmatpush.msra.mxu0 0.0
    %400 = vmatpush.msra.mxu0 0.0
    %401 = vmatpush.msra.mxu0 0.0
    %402 = vmatpush.msra.mxu0 0.0
    %403 = vmatpush.msra.mxu0 0.0
    %404 = vmatpush.msra.mxu0 0.0
    %405 = vmatpush.msra.mxu0 0.0
    %406 = vmatpush.msra.mxu0 %v387
    %407 = vmatpush.msra.mxu0 %v386
    %408 = vmatpush.msra.mxu0 %v385
    %409 = vmatpush.msra.mxu0 %v384
    %410 = vmatmul.f32.gmra.mxu0 %v392
    %v411 = vpop.f32.mrf.mxu0
    %v412 = vadd.f32 0.0, %v411
    %413 = vdwg.mxu0
    %v415 = vrot.slane %v412, 6
    %v416 = vrot.slane %v412, 7
    %v419 = vadd.f32 %v123, %v415
    %v420 = vadd.f32 %v126, %v416
    %v421 = vxor.u32 %v419, 2147483648
    %v422 = vxor.u32 %v420, 2147483648
    %v423 = vmul.f32 %v421, 1.442695
    %v424 = vpow.pop %v423
    %v425 = vmul.f32 %v422, 1.442695
    %v426 = vpow.pop %v425
    %v427 = vadd.f32 %v424, 1.0
    %v428 = vadd.f32 %v426, 1.0
    %v429 = vrcp.pop %v427
    %v430 = vmul.f32 %v427, %v429
    %v431 = vsub.f32 1.0, %v430
    %v432 = vmul.f32 %v429, %v431
    %v433 = vadd.f32 %v429, %v432
    %vm434 = vweird.f32 %v427
    %vm435 = vweird.f32 %v429
    %vm436 = vmor %vm434, %vm435
    %v437 = vsel %vm436, %v429, %v433
    %v438 = vand.u32 2147483647, %v427
    %vm439 = vcmp.eq.f32.partialorder %v438, 8.507059e+37
    %v440 = vand.u32 %v427, 2147483648
    %v441 = vor.u32 1.1754944e-38, %v440
    %v442 = vsel %vm439, %v441, %v437
    %v443 = vmul.f32 1.0, %v442
    %v444 = vrcp.pop %v428
    %v445 = vmul.f32 %v428, %v444
    %v446 = vsub.f32 1.0, %v445
    %v447 = vmul.f32 %v444, %v446
    %v448 = vadd.f32 %v444, %v447
    %vm449 = vweird.f32 %v428
    %vm450 = vweird.f32 %v444
    %vm451 = vmor %vm449, %vm450
    %v452 = vsel %vm451, %v444, %v448
    %v453 = vand.u32 2147483647, %v428
    %vm454 = vcmp.eq.f32.partialorder %v453, 8.507059e+37
    %v455 = vand.u32 %v428, 2147483648
    %v456 = vor.u32 1.1754944e-38, %v455
    %v457 = vsel %vm454, %v456, %v452
    %v458 = vmul.f32 1.0, %v457
    %v459 = vtanh.pop %v419
    %v460 = vtanh.pop %v420
    %v463 = vrot.slane %v359, 7
    %v464 = vrot.slane %v360, 7
    %v467 = vmul.f32 %v443, %v463
    %v468 = vmul.f32 %v458, %v464
    %471 = vrot.lane.b32.xlu0 %v459, 64
    %v472 = vpop.permute.xlu0 %471
    %473 = vrot.lane.b32.xlu0 %v460, 64
    %v474 = vpop.permute.xlu0 %473
    %v477 = vmul.f32 %v443, %v472
    %v478 = vmul.f32 %v458, %v474
    %481 = vrot.lane.b32.xlu0 %v477, 32
    %v482 = vpop.permute.xlu0 %481
    %483 = vrot.lane.b32.xlu0 %v478, 32
    %v484 = vpop.permute.xlu0 %483
    %v487 = vadd.f32 %v467, %v482
    %v488 = vadd.f32 %v468, %v484
    %v489 = vtanh.pop %v487
    %v490 = vtanh.pop %v488
    %493 = vrot.lane.b32.xlu0 %v489, 64
    %v494 = vpop.permute.xlu0 %493
    %495 = vrot.lane.b32.xlu0 %v490, 64
    %v496 = vpop.permute.xlu0 %495
    %v499 = vmul.f32 %v443, %v494
    %v500 = vmul.f32 %v458, %v496
    %503 = vrot.lane.b32.xlu0 %v499, 32
    %v504 = vpop.permute.xlu0 %503
    %505 = vrot.lane.b32.xlu0 %v500, 32
    %v506 = vpop.permute.xlu0 %505
    %vm509 = vcmask 256002
    %510 = vst.msk [vmem:[#allocation9] sm:$0x4] %vm509, %v504
    %511 = vst.msk [vmem:[#allocation9 + $0x8] sm:$0x4] %vm509, %v506
    %v512 = vld [vmem:[#allocation7] sm:$0xff]
    %v513 = vld [vmem:[#allocation7 + $0x8] sm:$0xff]
    %v514 = vld [vmem:[#allocation7 + $0x10] sm:$0xff]
    %v515 = vld [vmem:[#allocation7 + $0x18] sm:$0xff]
    %v516 = vrot.slane %v499, 2
    %v517 = vrot.slane %v500, 1
    %v518 = vsel %vm261, %v517, %v516
    %519 = vrot.lane.b32.xlu0 %v518, 32
    %v520 = vpop.permute.xlu0 %519
    %v521 = vsel %vm98, %v520, 0
    %523 = vmatpush.msra.mxu0 0.0
    %524 = vmatpush.msra.mxu0 0.0
    %525 = vmatpush.msra.mxu0 0.0
    %526 = vmatpush.msra.mxu0 0.0
    %527 = vmatpush.msra.mxu0 0.0
    %528 = vmatpush.msra.mxu0 0.0
    %529 = vmatpush.msra.mxu0 0.0
    %530 = vmatpush.msra.mxu0 0.0
    %531 = vmatpush.msra.mxu0 0.0
    %532 = vmatpush.msra.mxu0 0.0
    %533 = vmatpush.msra.mxu0 0.0
    %534 = vmatpush.msra.mxu0 0.0
    %535 = vmatpush.msra.mxu0 %v515
    %536 = vmatpush.msra.mxu0 %v514
    %537 = vmatpush.msra.mxu0 %v513
    %538 = vmatpush.msra.mxu0 %v512
    %539 = vmatmul.f32.gmra.mxu0 %v521
    %v540 = vpop.f32.mrf.mxu0
    %v541 = vadd.f32 0.0, %v540
    %542 = vdwg.mxu0
    %v544 = vrot.slane %v541, 5
    %v545 = vrot.slane %v541, 6
    %v548 = vadd.f32 %v123, %v544
    %v549 = vadd.f32 %v126, %v545
    %v550 = vxor.u32 %v548, 2147483648
    %v551 = vxor.u32 %v549, 2147483648
    %v552 = vmul.f32 %v550, 1.442695
    %v553 = vpow.pop %v552
    %v554 = vmul.f32 %v551, 1.442695
    %v555 = vpow.pop %v554
    %v556 = vadd.f32 %v553, 1.0
    %v557 = vadd.f32 %v555, 1.0
    %v558 = vrcp.pop %v556
    %v559 = vmul.f32 %v556, %v558
    %v560 = vsub.f32 1.0, %v559
    %v561 = vmul.f32 %v558, %v560
    %v562 = vadd.f32 %v558, %v561
    %vm563 = vweird.f32 %v556
    %vm564 = vweird.f32 %v558
    %vm565 = vmor %vm563, %vm564
    %v566 = vsel %vm565, %v558, %v562
    %v567 = vand.u32 2147483647, %v556
    %vm568 = vcmp.eq.f32.partialorder %v567, 8.507059e+37
    %v569 = vand.u32 %v556, 2147483648
    %v570 = vor.u32 1.1754944e-38, %v569
    %v571 = vsel %vm568, %v570, %v566
    %v572 = vmul.f32 1.0, %v571
    %v573 = vrcp.pop %v557
    %v574 = vmul.f32 %v557, %v573
    %v575 = vsub.f32 1.0, %v574
    %v576 = vmul.f32 %v573, %v575
    %v577 = vadd.f32 %v573, %v576
    %vm578 = vweird.f32 %v557
    %vm579 = vweird.f32 %v573
    %vm580 = vmor %vm578, %vm579
    %v581 = vsel %vm580, %v573, %v577
    %v582 = vand.u32 2147483647, %v557
    %vm583 = vcmp.eq.f32.partialorder %v582, 8.507059e+37
    %v584 = vand.u32 %v557, 2147483648
    %v585 = vor.u32 1.1754944e-38, %v584
    %v586 = vsel %vm583, %v585, %v581
    %v587 = vmul.f32 1.0, %v586
    %v588 = vtanh.pop %v548
    %v589 = vtanh.pop %v549
    %v592 = vrot.slane %v487, 7
    %v593 = vrot.slane %v488, 7
    %v596 = vmul.f32 %v572, %v592
    %v597 = vmul.f32 %v587, %v593
    %600 = vrot.lane.b32.xlu0 %v588, 64
    %v601 = vpop.permute.xlu0 %600
    %602 = vrot.lane.b32.xlu0 %v589, 64
    %v603 = vpop.permute.xlu0 %602
    %v606 = vmul.f32 %v572, %v601
    %v607 = vmul.f32 %v587, %v603
    %610 = vrot.lane.b32.xlu0 %v606, 32
    %v611 = vpop.permute.xlu0 %610
    %612 = vrot.lane.b32.xlu0 %v607, 32
    %v613 = vpop.permute.xlu0 %612
    %v616 = vadd.f32 %v596, %v611
    %v617 = vadd.f32 %v597, %v613
    %v618 = vtanh.pop %v616
    %v619 = vtanh.pop %v617
    %622 = vrot.lane.b32.xlu0 %v618, 64
    %v623 = vpop.permute.xlu0 %622
    %624 = vrot.lane.b32.xlu0 %v619, 64
    %v625 = vpop.permute.xlu0 %624
    %v628 = vmul.f32 %v572, %v623
    %v629 = vmul.f32 %v587, %v625
    %632 = vrot.lane.b32.xlu0 %v628, 32
    %v633 = vpop.permute.xlu0 %632
    %634 = vrot.lane.b32.xlu0 %v629, 32
    %v635 = vpop.permute.xlu0 %634
    %vm638 = vcmask 257027
    %639 = vst.msk [vmem:[#allocation9] sm:$0x8] %vm638, %v633
    %640 = vst.msk [vmem:[#allocation9 + $0x8] sm:$0x8] %vm638, %v635
    %v641 = vld [vmem:[#allocation7] sm:$0xff]
    %v642 = vld [vmem:[#allocation7 + $0x8] sm:$0xff]
    %v643 = vld [vmem:[#allocation7 + $0x10] sm:$0xff]
    %v644 = vld [vmem:[#allocation7 + $0x18] sm:$0xff]
    %v645 = vrot.slane %v628, 3
    %v646 = vrot.slane %v629, 2
    %v647 = vsel %vm261, %v646, %v645
    %648 = vrot.lane.b32.xlu0 %v647, 32
    %v649 = vpop.permute.xlu0 %648
    %v650 = vsel %vm98, %v649, 0
    %652 = vmatpush.msra.mxu0 0.0
    %653 = vmatpush.msra.mxu0 0.0
    %654 = vmatpush.msra.mxu0 0.0
    %655 = vmatpush.msra.mxu0 0.0
    %656 = vmatpush.msra.mxu0 0.0
    %657 = vmatpush.msra.mxu0 0.0
    %658 = vmatpush.msra.mxu0 0.0
    %659 = vmatpush.msra.mxu0 0.0
    %660 = vmatpush.msra.mxu0 0.0
    %661 = vmatpush.msra.mxu0 0.0
    %662 = vmatpush.msra.mxu0 0.0
    %663 = vmatpush.msra.mxu0 0.0
    %664 = vmatpush.msra.mxu0 %v644
    %665 = vmatpush.msra.mxu0 %v643
    %666 = vmatpush.msra.mxu0 %v642
    %667 = vmatpush.msra.mxu0 %v641
    %668 = vmatmul.f32.gmra.mxu0 %v650
    %v669 = vpop.f32.mrf.mxu0
    %v670 = vadd.f32 0.0, %v669
    %671 = vdwg.mxu0
    %v673 = vrot.slane %v670, 4
    %v674 = vrot.slane %v670, 5
    %v677 = vadd.f32 %v123, %v673
    %v678 = vadd.f32 %v126, %v674
    %v679 = vxor.u32 %v677, 2147483648
    %v680 = vxor.u32 %v678, 2147483648
    %v681 = vmul.f32 %v679, 1.442695
    %v682 = vpow.pop %v681
    %v683 = vmul.f32 %v680, 1.442695
    %v684 = vpow.pop %v683
    %v685 = vadd.f32 %v682, 1.0
    %v686 = vadd.f32 %v684, 1.0
    %v687 = vrcp.pop %v685
    %v688 = vmul.f32 %v685, %v687
    %v689 = vsub.f32 1.0, %v688
    %v690 = vmul.f32 %v687, %v689
    %v691 = vadd.f32 %v687, %v690
    %vm692 = vweird.f32 %v685
    %vm693 = vweird.f32 %v687
    %vm694 = vmor %vm692, %vm693
    %v695 = vsel %vm694, %v687, %v691
    %v696 = vand.u32 2147483647, %v685
    %vm697 = vcmp.eq.f32.partialorder %v696, 8.507059e+37
    %v698 = vand.u32 %v685, 2147483648
    %v699 = vor.u32 1.1754944e-38, %v698
    %v700 = vsel %vm697, %v699, %v695
    %v701 = vmul.f32 1.0, %v700
    %v702 = vrcp.pop %v686
    %v703 = vmul.f32 %v686, %v702
    %v704 = vsub.f32 1.0, %v703
    %v705 = vmul.f32 %v702, %v704
    %v706 = vadd.f32 %v702, %v705
    %vm707 = vweird.f32 %v686
    %vm708 = vweird.f32 %v702
    %vm709 = vmor %vm707, %vm708
    %v710 = vsel %vm709, %v702, %v706
    %v711 = vand.u32 2147483647, %v686
    %vm712 = vcmp.eq.f32.partialorder %v711, 8.507059e+37
    %v713 = vand.u32 %v686, 2147483648
    %v714 = vor.u32 1.1754944e-38, %v713
    %v715 = vsel %vm712, %v714, %v710
    %v716 = vmul.f32 1.0, %v715
    %v717 = vtanh.pop %v677
    %v718 = vtanh.pop %v678
    %v721 = vrot.slane %v616, 7
    %v722 = vrot.slane %v617, 7
    %v725 = vmul.f32 %v701, %v721
    %v726 = vmul.f32 %v716, %v722
    %729 = vrot.lane.b32.xlu0 %v717, 64
    %v730 = vpop.permute.xlu0 %729
    %731 = vrot.lane.b32.xlu0 %v718, 64
    %v732 = vpop.permute.xlu0 %731
    %v735 = vmul.f32 %v701, %v730
    %v736 = vmul.f32 %v716, %v732
    %739 = vrot.lane.b32.xlu0 %v735, 32
    %v740 = vpop.permute.xlu0 %739
    %741 = vrot.lane.b32.xlu0 %v736, 32
    %v742 = vpop.permute.xlu0 %741
    %v745 = vadd.f32 %v725, %v740
    %v746 = vadd.f32 %v726, %v742
    %v747 = vtanh.pop %v745
    %v748 = vtanh.pop %v746
    %751 = vrot.lane.b32.xlu0 %v747, 64
    %v752 = vpop.permute.xlu0 %751
    %753 = vrot.lane.b32.xlu0 %v748, 64
    %v754 = vpop.permute.xlu0 %753
    %v757 = vmul.f32 %v701, %v752
    %v758 = vmul.f32 %v716, %v754
    %761 = vrot.lane.b32.xlu0 %v757, 32
    %v762 = vpop.permute.xlu0 %761
    %763 = vrot.lane.b32.xlu0 %v758, 32
    %v764 = vpop.permute.xlu0 %763
    %vm767 = vcmask 258052
    %768 = vst.msk [vmem:[#allocation9] sm:$0x10] %vm767, %v762
    %769 = vst.msk [vmem:[#allocation9 + $0x8] sm:$0x10] %vm767, %v764
    %v770 = vld [vmem:[#allocation7] sm:$0xff]
    %v771 = vld [vmem:[#allocation7 + $0x8] sm:$0xff]
    %v772 = vld [vmem:[#allocation7 + $0x10] sm:$0xff]
    %v773 = vld [vmem:[#allocation7 + $0x18] sm:$0xff]
    %v774 = vrot.slane %v757, 4
    %v775 = vrot.slane %v758, 3
    %v776 = vsel %vm261, %v775, %v774
    %777 = vrot.lane.b32.xlu0 %v776, 32
    %v778 = vpop.permute.xlu0 %777
    %v779 = vsel %vm98, %v778, 0
    %781 = vmatpush.msra.mxu0 0.0
    %782 = vmatpush.msra.mxu0 0.0
    %783 = vmatpush.msra.mxu0 0.0
    %784 = vmatpush.msra.mxu0 0.0
    %785 = vmatpush.msra.mxu0 0.0
    %786 = vmatpush.msra.mxu0 0.0
    %787 = vmatpush.msra.mxu0 0.0
    %788 = vmatpush.msra.mxu0 0.0
    %789 = vmatpush.msra.mxu0 0.0
    %790 = vmatpush.msra.mxu0 0.0
    %791 = vmatpush.msra.mxu0 0.0
    %792 = vmatpush.msra.mxu0 0.0
    %793 = vmatpush.msra.mxu0 %v773
    %794 = vmatpush.msra.mxu0 %v772
    %795 = vmatpush.msra.mxu0 %v771
    %796 = vmatpush.msra.mxu0 %v770
    %797 = vmatmul.f32.gmra.mxu0 %v779
    %v798 = vpop.f32.mrf.mxu0
    %v799 = vadd.f32 0.0, %v798
    %800 = vdwg.mxu0
    %v802 = vrot.slane %v799, 3
    %v803 = vrot.slane %v799, 4
    %v806 = vadd.f32 %v123, %v802
    %v807 = vadd.f32 %v126, %v803
    %v808 = vxor.u32 %v806, 2147483648
    %v809 = vxor.u32 %v807, 2147483648
    %v810 = vmul.f32 %v808, 1.442695
    %v811 = vpow.pop %v810
    %v812 = vmul.f32 %v809, 1.442695
    %v813 = vpow.pop %v812
    %v814 = vadd.f32 %v811, 1.0
    %v815 = vadd.f32 %v813, 1.0
    %v816 = vrcp.pop %v814
    %v817 = vmul.f32 %v814, %v816
    %v818 = vsub.f32 1.0, %v817
    %v819 = vmul.f32 %v816, %v818
    %v820 = vadd.f32 %v816, %v819
    %vm821 = vweird.f32 %v814
    %vm822 = vweird.f32 %v816
    %vm823 = vmor %vm821, %vm822
    %v824 = vsel %vm823, %v816, %v820
    %v825 = vand.u32 2147483647, %v814
    %vm826 = vcmp.eq.f32.partialorder %v825, 8.507059e+37
    %v827 = vand.u32 %v814, 2147483648
    %v828 = vor.u32 1.1754944e-38, %v827
    %v829 = vsel %vm826, %v828, %v824
    %v830 = vmul.f32 1.0, %v829
    %v831 = vrcp.pop %v815
    %v832 = vmul.f32 %v815, %v831
    %v833 = vsub.f32 1.0, %v832
    %v834 = vmul.f32 %v831, %v833
    %v835 = vadd.f32 %v831, %v834
    %vm836 = vweird.f32 %v815
    %vm837 = vweird.f32 %v831
    %vm838 = vmor %vm836, %vm837
    %v839 = vsel %vm838, %v831, %v835
    %v840 = vand.u32 2147483647, %v815
    %vm841 = vcmp.eq.f32.partialorder %v840, 8.507059e+37
    %v842 = vand.u32 %v815, 2147483648
    %v843 = vor.u32 1.1754944e-38, %v842
    %v844 = vsel %vm841, %v843, %v839
    %v845 = vmul.f32 1.0, %v844
    %v846 = vtanh.pop %v806
    %v847 = vtanh.pop %v807
    %v850 = vrot.slane %v745, 7
    %v851 = vrot.slane %v746, 7
    %v854 = vmul.f32 %v830, %v850
    %v855 = vmul.f32 %v845, %v851
    %858 = vrot.lane.b32.xlu0 %v846, 64
    %v859 = vpop.permute.xlu0 %858
    %860 = vrot.lane.b32.xlu0 %v847, 64
    %v861 = vpop.permute.xlu0 %860
    %v864 = vmul.f32 %v830, %v859
    %v865 = vmul.f32 %v845, %v861
    %868 = vrot.lane.b32.xlu0 %v864, 32
    %v869 = vpop.permute.xlu0 %868
    %870 = vrot.lane.b32.xlu0 %v865, 32
    %v871 = vpop.permute.xlu0 %870
    %v874 = vadd.f32 %v854, %v869
    %v875 = vadd.f32 %v855, %v871
    %v876 = vtanh.pop %v874
    %v877 = vtanh.pop %v875
    %880 = vrot.lane.b32.xlu0 %v876, 64
    %v881 = vpop.permute.xlu0 %880
    %882 = vrot.lane.b32.xlu0 %v877, 64
    %v883 = vpop.permute.xlu0 %882
    %v886 = vmul.f32 %v830, %v881
    %v887 = vmul.f32 %v845, %v883
    %890 = vrot.lane.b32.xlu0 %v886, 32
    %v891 = vpop.permute.xlu0 %890
    %892 = vrot.lane.b32.xlu0 %v887, 32
    %v893 = vpop.permute.xlu0 %892
    %vm896 = vcmask 259077
    %897 = vst.msk [vmem:[#allocation9] sm:$0x20] %vm896, %v891
    %898 = vst.msk [vmem:[#allocation9 + $0x8] sm:$0x20] %vm896, %v893
    %v899 = vld [vmem:[#allocation7] sm:$0xff]
    %v900 = vld [vmem:[#allocation7 + $0x8] sm:$0xff]
    %v901 = vld [vmem:[#allocation7 + $0x10] sm:$0xff]
    %v902 = vld [vmem:[#allocation7 + $0x18] sm:$0xff]
    %v903 = vrot.slane %v886, 5
    %v904 = vrot.slane %v887, 4
    %v905 = vsel %vm261, %v904, %v903
    %906 = vrot.lane.b32.xlu0 %v905, 32
    %v907 = vpop.permute.xlu0 %906
    %v908 = vsel %vm98, %v907, 0
    %910 = vmatpush.msra.mxu0 0.0
    %911 = vmatpush.msra.mxu0 0.0
    %912 = vmatpush.msra.mxu0 0.0
    %913 = vmatpush.msra.mxu0 0.0
    %914 = vmatpush.msra.mxu0 0.0
    %915 = vmatpush.msra.mxu0 0.0
    %916 = vmatpush.msra.mxu0 0.0
    %917 = vmatpush.msra.mxu0 0.0
    %918 = vmatpush.msra.mxu0 0.0
    %919 = vmatpush.msra.mxu0 0.0
    %920 = vmatpush.msra.mxu0 0.0
    %921 = vmatpush.msra.mxu0 0.0
    %922 = vmatpush.msra.mxu0 %v902
    %923 = vmatpush.msra.mxu0 %v901
    %924 = vmatpush.msra.mxu0 %v900
    %925 = vmatpush.msra.mxu0 %v899
    %926 = vmatmul.f32.gmra.mxu0 %v908
    %v927 = vpop.f32.mrf.mxu0
    %v928 = vadd.f32 0.0, %v927
    %929 = vdwg.mxu0
    %v931 = vrot.slane %v928, 2
    %v932 = vrot.slane %v928, 3
    %v935 = vadd.f32 %v123, %v931
    %v936 = vadd.f32 %v126, %v932
    %v937 = vxor.u32 %v935, 2147483648
    %v938 = vxor.u32 %v936, 2147483648
    %v939 = vmul.f32 %v937, 1.442695
    %v940 = vpow.pop %v939
    %v941 = vmul.f32 %v938, 1.442695
    %v942 = vpow.pop %v941
    %v943 = vadd.f32 %v940, 1.0
    %v944 = vadd.f32 %v942, 1.0
    %v945 = vrcp.pop %v943
    %v946 = vmul.f32 %v943, %v945
    %v947 = vsub.f32 1.0, %v946
    %v948 = vmul.f32 %v945, %v947
    %v949 = vadd.f32 %v945, %v948
    %vm950 = vweird.f32 %v943
    %vm951 = vweird.f32 %v945
    %vm952 = vmor %vm950, %vm951
    %v953 = vsel %vm952, %v945, %v949
    %v954 = vand.u32 2147483647, %v943
    %vm955 = vcmp.eq.f32.partialorder %v954, 8.507059e+37
    %v956 = vand.u32 %v943, 2147483648
    %v957 = vor.u32 1.1754944e-38, %v956
    %v958 = vsel %vm955, %v957, %v953
    %v959 = vmul.f32 1.0, %v958
    %v960 = vrcp.pop %v944
    %v961 = vmul.f32 %v944, %v960
    %v962 = vsub.f32 1.0, %v961
    %v963 = vmul.f32 %v960, %v962
    %v964 = vadd.f32 %v960, %v963
    %vm965 = vweird.f32 %v944
    %vm966 = vweird.f32 %v960
    %vm967 = vmor %vm965, %vm966
    %v968 = vsel %vm967, %v960, %v964
    %v969 = vand.u32 2147483647, %v944
    %vm970 = vcmp.eq.f32.partialorder %v969, 8.507059e+37
    %v971 = vand.u32 %v944, 2147483648
    %v972 = vor.u32 1.1754944e-38, %v971
    %v973 = vsel %vm970, %v972, %v968
    %v974 = vmul.f32 1.0, %v973
    %v975 = vtanh.pop %v935
    %v976 = vtanh.pop %v936
    %v979 = vrot.slane %v874, 7
    %v980 = vrot.slane %v875, 7
    %v983 = vmul.f32 %v959, %v979
    %v984 = vmul.f32 %v974, %v980
    %987 = vrot.lane.b32.xlu0 %v975, 64
    %v988 = vpop.permute.xlu0 %987
    %989 = vrot.lane.b32.xlu0 %v976, 64
    %v990 = vpop.permute.xlu0 %989
    %v993 = vmul.f32 %v959, %v988
    %v994 = vmul.f32 %v974, %v990
    %997 = vrot.lane.b32.xlu0 %v993, 32
    %v998 = vpop.permute.xlu0 %997
    %999 = vrot.lane.b32.xlu0 %v994, 32
    %v1000 = vpop.permute.xlu0 %999
    %v1003 = vadd.f32 %v983, %v998
    %v1004 = vadd.f32 %v984, %v1000
    %v1005 = vtanh.pop %v1003
    %v1006 = vtanh.pop %v1004
    %1009 = vrot.lane.b32.xlu0 %v1005, 64
    %v1010 = vpop.permute.xlu0 %1009
    %1011 = vrot.lane.b32.xlu0 %v1006, 64
    %v1012 = vpop.permute.xlu0 %1011
    %v1015 = vmul.f32 %v959, %v1010
    %v1016 = vmul.f32 %v974, %v1012
    %1019 = vrot.lane.b32.xlu0 %v1015, 32
    %v1020 = vpop.permute.xlu0 %1019
    %1021 = vrot.lane.b32.xlu0 %v1016, 32
    %v1022 = vpop.permute.xlu0 %1021
    %vm1025 = vcmask 260102
    %1026 = vst.msk [vmem:[#allocation9] sm:$0x40] %vm1025, %v1020
    %1027 = vst.msk [vmem:[#allocation9 + $0x8] sm:$0x40] %vm1025, %v1022
    %v1028 = vld [vmem:[#allocation7] sm:$0xff]
    %v1029 = vld [vmem:[#allocation7 + $0x8] sm:$0xff]
    %v1030 = vld [vmem:[#allocation7 + $0x10] sm:$0xff]
    %v1031 = vld [vmem:[#allocation7 + $0x18] sm:$0xff]
    %v1032 = vrot.slane %v1015, 6
    %v1033 = vrot.slane %v1016, 5
    %v1034 = vsel %vm261, %v1033, %v1032
    %1035 = vrot.lane.b32.xlu0 %v1034, 32
    %v1036 = vpop.permute.xlu0 %1035
    %v1037 = vsel %vm98, %v1036, 0
    %1039 = vmatpush.msra.mxu0 0.0
    %1040 = vmatpush.msra.mxu0 0.0
    %1041 = vmatpush.msra.mxu0 0.0
    %1042 = vmatpush.msra.mxu0 0.0
    %1043 = vmatpush.msra.mxu0 0.0
    %1044 = vmatpush.msra.mxu0 0.0
    %1045 = vmatpush.msra.mxu0 0.0
    %1046 = vmatpush.msra.mxu0 0.0
    %1047 = vmatpush.msra.mxu0 0.0
    %1048 = vmatpush.msra.mxu0 0.0
    %1049 = vmatpush.msra.mxu0 0.0
    %1050 = vmatpush.msra.mxu0 0.0
    %1051 = vmatpush.msra.mxu0 %v1031
    %1052 = vmatpush.msra.mxu0 %v1030
    %1053 = vmatpush.msra.mxu0 %v1029
    %1054 = vmatpush.msra.mxu0 %v1028
    %1055 = vmatmul.f32.gmra.mxu0 %v1037
    %v1056 = vpop.f32.mrf.mxu0
    %v1057 = vadd.f32 0.0, %v1056
    %1058 = vdwg.mxu0
    %v1060 = vrot.slane %v1057, 1
    %v1061 = vrot.slane %v1057, 2
    %v1064 = vadd.f32 %v123, %v1060
    %v1065 = vadd.f32 %v126, %v1061
    %v1066 = vxor.u32 %v1064, 2147483648
    %v1067 = vxor.u32 %v1065, 2147483648
    %v1068 = vmul.f32 %v1066, 1.442695
    %v1069 = vpow.pop %v1068
    %v1070 = vmul.f32 %v1067, 1.442695
    %v1071 = vpow.pop %v1070
    %v1072 = vadd.f32 %v1069, 1.0
    %v1073 = vadd.f32 %v1071, 1.0
    %v1074 = vrcp.pop %v1072
    %v1075 = vmul.f32 %v1072, %v1074
    %v1076 = vsub.f32 1.0, %v1075
    %v1077 = vmul.f32 %v1074, %v1076
    %v1078 = vadd.f32 %v1074, %v1077
    %vm1079 = vweird.f32 %v1072
    %vm1080 = vweird.f32 %v1074
    %vm1081 = vmor %vm1079, %vm1080
    %v1082 = vsel %vm1081, %v1074, %v1078
    %v1083 = vand.u32 2147483647, %v1072
    %vm1084 = vcmp.eq.f32.partialorder %v1083, 8.507059e+37
    %v1085 = vand.u32 %v1072, 2147483648
    %v1086 = vor.u32 1.1754944e-38, %v1085
    %v1087 = vsel %vm1084, %v1086, %v1082
    %v1088 = vmul.f32 1.0, %v1087
    %v1089 = vrcp.pop %v1073
    %v1090 = vmul.f32 %v1073, %v1089
    %v1091 = vsub.f32 1.0, %v1090
    %v1092 = vmul.f32 %v1089, %v1091
    %v1093 = vadd.f32 %v1089, %v1092
    %vm1094 = vweird.f32 %v1073
    %vm1095 = vweird.f32 %v1089
    %vm1096 = vmor %vm1094, %vm1095
    %v1097 = vsel %vm1096, %v1089, %v1093
    %v1098 = vand.u32 2147483647, %v1073
    %vm1099 = vcmp.eq.f32.partialorder %v1098, 8.507059e+37
    %v1100 = vand.u32 %v1073, 2147483648
    %v1101 = vor.u32 1.1754944e-38, %v1100
    %v1102 = vsel %vm1099, %v1101, %v1097
    %v1103 = vmul.f32 1.0, %v1102
    %v1104 = vtanh.pop %v1064
    %v1105 = vtanh.pop %v1065
    %v1108 = vrot.slane %v1003, 7
    %v1109 = vrot.slane %v1004, 7
    %v1112 = vmul.f32 %v1088, %v1108
    %v1113 = vmul.f32 %v1103, %v1109
    %1116 = vrot.lane.b32.xlu0 %v1104, 64
    %v1117 = vpop.permute.xlu0 %1116
    %1118 = vrot.lane.b32.xlu0 %v1105, 64
    %v1119 = vpop.permute.xlu0 %1118
    %v1122 = vmul.f32 %v1088, %v1117
    %v1123 = vmul.f32 %v1103, %v1119
    %1126 = vrot.lane.b32.xlu0 %v1122, 32
    %v1127 = vpop.permute.xlu0 %1126
    %1128 = vrot.lane.b32.xlu0 %v1123, 32
    %v1129 = vpop.permute.xlu0 %1128
    %v1132 = vadd.f32 %v1112, %v1127
    %v1133 = vadd.f32 %v1113, %v1129
    %v1134 = vtanh.pop %v1132
    %v1135 = vtanh.pop %v1133
    %1138 = vrot.lane.b32.xlu0 %v1134, 64
    %v1139 = vpop.permute.xlu0 %1138
    %1140 = vrot.lane.b32.xlu0 %v1135, 64
    %v1141 = vpop.permute.xlu0 %1140
    %v1144 = vmul.f32 %v1088, %v1139
    %v1145 = vmul.f32 %v1103, %v1141
    %1148 = vrot.lane.b32.xlu0 %v1144, 32
    %v1149 = vpop.permute.xlu0 %1148
    %1150 = vrot.lane.b32.xlu0 %v1145, 32
    %v1151 = vpop.permute.xlu0 %1150
    %vm1154 = vcmask 261127
    %1155 = vst.msk [vmem:[#allocation9] sm:$0x80] %vm1154, %v1149
    %1156 = vst.msk [vmem:[#allocation9 + $0x8] sm:$0x80] %vm1154, %v1151
    %v1157 = vrot.slane %v1145, 7
    %1158 = vrot.lane.b32.xlu0 %v1157, 32
    %v1159 = vpop.permute.xlu0 %1158
    %1161 = vst.msk [vmem:[#allocation2 - $0x7] sm:$0x80] %vm1154, %v1149
    %1162 = vst.msk [vmem:[#allocation2 + $0x1] sm:$0x1] %vm253, %v1159
    %v1165 = vrot.slane %v1133, 7
    %1166 = vrot.lane.b32.xlu0 %v1132, 96
    %v1167 = vpop.permute.xlu0 %1166
    %1168 = vrot.lane.b32.xlu0 %v1165, 96
    %v1169 = vpop.permute.xlu0 %1168
    %1172 = vst.msk [vmem:[#allocation3 - $0x7] sm:$0x80] %vm1154, %v1167
    %1173 = vst.msk [vmem:[#allocation3 + $0x1] sm:$0x1] %vm253, %v1169
    // Predicated region
    $region38: #{tpu_custom_call.1} parent=1 // pred_check
      _
    $region39: #{tpu_custom_call.1} parent=1 // pred_check_branch
      %1175 = sbr.rel (0) target = $region41
    $region40: #{tpu_custom_call.1} parent=1 // pred_region
      %1177 = vsyncadd [#allocation6], 0
      %s1178 = sshll.u32 [#allocation9], 4
      %s1179 = int_to_ptr.vmem [resolvable:$true] %s1178
      %s1180 = sshll.u32 %s6, 4
      %s1181 = int_to_ptr.hbm [resolvable:$true] %s1180
      %1186 = dma.vmem_to_hbm [thread:$0]  %s1179, 256, %s1181, [#allocation6], 128, 128, 8
    $region41: #{tpu_custom_call.1} parent=1 // pred_fallthru
      _
    // Predicated region
    $region42: #{tpu_custom_call.1} parent=1 // pred_check
      _
    $region43: #{tpu_custom_call.1} parent=1 // pred_check_branch
      %1188 = sbr.rel (0) target = $region45
    $region44: #{tpu_custom_call.1} parent=1 // pred_region
      %1190 = dma.done [#allocation6], 256
    $region45: #{tpu_custom_call.1} parent=1 // pred_fallthru
      _
    %1191 = vsyncpa [#allocation5], 1
    %1192 = vsyncpa [#allocation8], 1
    %1193 = vsyncpa [#allocation6], 1

</llo_original>
